<compile_context>
chip_gen: v7x
topology: tpu7x:2x2x1
jax: 0.10.0
libtpu: 0.0.40
codegen_flags: <defaults>
</compile_context>

<pallas_src>
import jax
import jax.numpy as jnp
from jax.experimental import pallas as pl
from jax.experimental.pallas import tpu as pltpu


# ---------------------------------------------------------------------------
# Fused encoder kernel: embedding + LSTM over the whole sequence + output FC
# ---------------------------------------------------------------------------
def _encoder_fused_kernel(tok_ref, h0_ref, c0_ref, emb_wx_ref, w_hh_ref,
                          b_ref, fc_w_ref, fc_b_ref,
                          logits_ref, hn_ref, cn_ref,
                          xproj_ref, hs_ref):
    N = tok_ref.shape[0]                 # T*B, time-major rows (row = t*B + b)
    B, H = h0_ref.shape
    T = N // B
    V = emb_wx_ref.shape[0]
    G = w_hh_ref.shape[1]                # 4H
    Vpad = fc_w_ref.shape[1]             # vocab padded to a multiple of 128

    # ---- Input projection for ALL timesteps in ONE MXU call (independent of
    # the recurrence -> off the serial h->h chain).  The embedding lookup is
    # folded in:  onehot(tok) @ (Emb @ W_ih^T) == emb[tok] @ W_ih^T, and the
    # pre-summed LSTM bias is folded into the same pass.
    lane_iota = jax.lax.broadcasted_iota(jnp.int32, (1, V), 1)        # (1, V)
    onehot_all = (tok_ref[...] == lane_iota).astype(jnp.float32)      # (N, V)
    xproj_ref[...] = (jnp.dot(onehot_all, emb_wx_ref[...],
                              preferred_element_type=jnp.float32)
                      + jnp.broadcast_to(b_ref[...], (N, G)))         # (N, 4H)

    w_hh = w_hh_ref[...]                                              # (H, 4H)
    h = h0_ref[...]                                                   # (B, H)
    c = c0_ref[...]                                                   # (B, H)

    # ---- Recurrence: only the truly sequential work stays in the loop
    # (one (B,H)@(H,4H) matmul + gate nonlinearities + state update).
    # Note: for bit-closeness at large H, set precision=HIGHEST on this dot.
    for t in range(T):
        r0 = t * B
        gates = (xproj_ref[pl.ds(r0, B), :]
                 + jnp.dot(h, w_hh, preferred_element_type=jnp.float32))
        sig = jax.nn.sigmoid(gates)                  # full-width sigmoid
        g_g = jnp.tanh(gates[:, 2 * H:3 * H])        # tanh only on the g slice
        i_g = sig[:, 0 * H:1 * H]
        f_g = sig[:, 1 * H:2 * H]
        o_g = sig[:, 3 * H:4 * H]
        c = f_g * c + i_g * g_g
        h = o_g * jnp.tanh(c)
        hs_ref[pl.ds(r0, B), :] = h                  # stash h_t for the FC

    # ---- Output FC hoisted out of the loop: one (T*B,H)@(H,Vpad) matmul and
    # one lane-dense, (8,128)-aligned store of the whole logits block.
    logits_ref[...] = (jnp.dot(hs_ref[...], fc_w_ref[...],
                               preferred_element_type=jnp.float32)
                       + jnp.broadcast_to(fc_b_ref[...], (N, Vpad)))

    hn_ref[...] = h
    cn_ref[...] = c


def _full_spec(shape):
    # Whole array as a single block (grid has one point).
    return pl.BlockSpec(shape, lambda i: (0,) * len(shape))


# ---------------------------------------------------------------------------
# Encoder forward (matches PyTorch Encoder.forward semantics)
# ---------------------------------------------------------------------------
@jax.jit
def encoder_forward(params, x_tokens, hidden=None):
    """
    x_tokens : (B, T)  int32
    hidden   : ((1,B,H), (1,B,H)) f32, or None
    returns  : logits (B*T, V), (h_n (1,B,H), c_n (1,B,H))
    """
    emb_wx = params["emb_wx"]          # (V, 4H)  fused Emb @ W_ih^T
    w_hh_t = params["w_hh_t"]          # (H, 4H)
    b = params["b"]                    # (1, 4H)  b_ih + b_hh
    fc_w_t = params["fc_w_t"]          # (H, Vpad)  zero-padded
    fc_b = params["fc_b"]              # (1, Vpad)  zero-padded

    V = emb_wx.shape[0]
    H = w_hh_t.shape[0]
    Vpad = fc_w_t.shape[1]
    B, T = x_tokens.shape
    N = T * B

    if hidden is None:
        h0 = jnp.zeros((B, H), jnp.float32)
        c0 = jnp.zeros((B, H), jnp.float32)
    else:
        h0 = hidden[0].reshape(B, H)
        c0 = hidden[1].reshape(B, H)

    # Time-major flattened tokens: row index = t*B + b.
    tok_tm = jnp.asarray(x_tokens, jnp.int32).T.reshape(N, 1)

    logits_pad, h_n, c_n = pl.pallas_call(
        _encoder_fused_kernel,
        grid=(1,),
        in_specs=[
            _full_spec((N, 1)),
            _full_spec((B, H)),
            _full_spec((B, H)),
            _full_spec((V, 4 * H)),
            _full_spec((H, 4 * H)),
            _full_spec((1, 4 * H)),
            _full_spec((H, Vpad)),
            _full_spec((1, Vpad)),
        ],
        out_specs=(
            _full_spec((N, Vpad)),
            _full_spec((B, H)),
            _full_spec((B, H)),
        ),
        out_shape=(
            jax.ShapeDtypeStruct((N, Vpad), jnp.float32),
            jax.ShapeDtypeStruct((B, H), jnp.float32),
            jax.ShapeDtypeStruct((B, H), jnp.float32),
        ),
        scratch_shapes=[
            pltpu.VMEM((N, 4 * H), jnp.float32),   # x-proj for all timesteps
            pltpu.VMEM((N, H), jnp.float32),       # h_t history for the FC
        ],
        compiler_params=pltpu.CompilerParams(
            dimension_semantics=("arbitrary",)),
    )(tok_tm, h0, c0, emb_wx, w_hh_t, b, fc_w_t, fc_b)

    # Time-major (T*B, Vpad) -> PyTorch's batch-major logits.view(-1, V), unpad.
    logits = (logits_pad.reshape(T, B, Vpad)
              .transpose(1, 0, 2)[:, :, :V]
              .reshape(B * T, V))
    return logits, (h_n[None], c_n[None])


# ---------------------------------------------------------------------------
# Deterministic parameter init (shapes from Encoder.__init__)
# ---------------------------------------------------------------------------
def init_params(key, vocab_size, embedding_dim, hidden_dim, lane=128):
    V, E, H = vocab_size, embedding_dim, hidden_dim
    k_emb, k_wih, k_whh, k_bih, k_bhh, k_fw, k_fb = jax.random.split(key, 7)
    k = 1.0 / jnp.sqrt(H)

    # nn.Embedding(V, E): N(0, 1)
    emb = jax.random.normal(k_emb, (V, E), jnp.float32)
    # nn.LSTM(E, H): U(-k, k), k = 1/sqrt(H); gate order i, f, g, o
    w_ih = jax.random.uniform(k_wih, (4 * H, E), jnp.float32, -k, k)
    w_hh = jax.random.uniform(k_whh, (4 * H, H), jnp.float32, -k, k)
    b_ih = jax.random.uniform(k_bih, (4 * H,), jnp.float32, -k, k)
    b_hh = jax.random.uniform(k_bhh, (4 * H,), jnp.float32, -k, k)
    # nn.Linear(H, V): U(-k, k)
    fc_w = jax.random.uniform(k_fw, (V, H), jnp.float32, -k, k)
    fc_b = jax.random.uniform(k_fb, (V,), jnp.float32, -k, k)

    # Pad the output/vocab dim to a multiple of 128 lanes for dense stores.
    Vpad = ((V + lane - 1) // lane) * lane
    fc_w_t = jnp.zeros((H, Vpad), jnp.float32).at[:, :V].set(fc_w.T)
    fc_b_pad = jnp.zeros((1, Vpad), jnp.float32).at[:, :V].set(fc_b)

    # Weight-only fusion: Emb @ W_ih^T computed ONCE here (full f32), so the
    # kernel never re-does this per forward.
    emb_wx = jnp.dot(emb, w_ih.T, precision=jax.lax.Precision.HIGHEST)

    return {
        "embedding": emb,                          # kept only for the reference
        "w_ih_t": w_ih.T,                          # kept only for the reference
        "emb_wx": emb_wx,                          # (V, 4H) fused kernel param
        "w_hh_t": w_hh.T,                          # (H, 4H)
        "b": (b_ih + b_hh).reshape(1, 4 * H),      # (1, 4H)
        "fc_w_t": fc_w_t,                          # (H, Vpad)
        "fc_b": fc_b_pad,                          # (1, Vpad)
    }


# ---------------------------------------------------------------------------
# Plain-JAX reference (for a silent sanity check)
# ---------------------------------------------------------------------------
def encoder_forward_ref(params, x_tokens, hidden):
    HIGH = jax.lax.Precision.HIGHEST
    V, E = params["embedding"].shape
    H = params["w_hh_t"].shape[0]
    B, T = x_tokens.shape

    e = jnp.take(params["embedding"], x_tokens, axis=0)          # (B, T, E)
    if hidden is None:
        h = jnp.zeros((B, H), jnp.float32)
        c = jnp.zeros((B, H), jnp.float32)
    else:
        h = hidden[0].reshape(B, H)
        c = hidden[1].reshape(B, H)

    hs = []
    for t in range(T):
        gates = (jnp.dot(e[:, t, :], params["w_ih_t"], precision=HIGH)
                 + jnp.dot(h, params["w_hh_t"], precision=HIGH)
                 + params["b"])
        i = jax.nn.sigmoid(gates[:, 0 * H:1 * H])
        f = jax.nn.sigmoid(gates[:, 1 * H:2 * H])
        g = jnp.tanh(gates[:, 2 * H:3 * H])
        o = jax.nn.sigmoid(gates[:, 3 * H:4 * H])
        c = f * c + i * g
        h = o * jnp.tanh(c)
        hs.append(h)

    lstm_out = jnp.stack(hs, axis=1)                             # (B, T, H)
    logits = (jnp.dot(lstm_out.reshape(B * T, H), params["fc_w_t"],
                      precision=HIGH)
              + params["fc_b"])[:, :V]                           # (B*T, V)
    return logits, (h[None], c[None])


# ---------------------------------------------------------------------------
if __name__ == "__main__":
    vocab_size = 64
    embedding_dim = 32
    hidden_dim = 32
    batch = 2
    seq_len = 8

    key = jax.random.PRNGKey(0)
    k_tok, k_h, k_c, k_params = jax.random.split(key, 4)

    x_tokens = jax.random.randint(k_tok, (batch, seq_len), 0, vocab_size,
                                  jnp.int32)
    h0 = jax.random.normal(k_h, (1, batch, hidden_dim), jnp.float32)
    c0 = jax.random.normal(k_c, (1, batch, hidden_dim), jnp.float32)
    params = init_params(k_params, vocab_size, embedding_dim, hidden_dim)

    # Run with explicit hidden state.
    logits, (h_n, c_n) = encoder_forward(params, x_tokens, (h0, c0))
    jax.block_until_ready((logits, h_n, c_n))
    # Also exercise the hidden=None (zero-init) path.
    logits0, (h_n0, c_n0) = encoder_forward(params, x_tokens, None)
    jax.block_until_ready((logits0, h_n0, c_n0))

    # Silent correctness checks against a plain-JAX reference.
    assert logits.shape == (batch * seq_len, vocab_size)
    assert h_n.shape == (1, batch, hidden_dim)
    assert c_n.shape == (1, batch, hidden_dim)

    ref_logits, (ref_h, ref_c) = encoder_forward_ref(params, x_tokens, (h0, c0))
    assert jnp.allclose(logits, ref_logits, atol=2e-4, rtol=2e-4)
    assert jnp.allclose(h_n, ref_h, atol=2e-4, rtol=2e-4)
    assert jnp.allclose(c_n, ref_c, atol=2e-4, rtol=2e-4)

    ref_logits0, (ref_h0, ref_c0) = encoder_forward_ref(params, x_tokens, None)
    assert jnp.allclose(logits0, ref_logits0, atol=2e-4, rtol=2e-4)
    assert jnp.allclose(h_n0, ref_h0, atol=2e-4, rtol=2e-4)
    assert jnp.allclose(c_n0, ref_c0, atol=2e-4, rtol=2e-4)

    print("KERNEL_OK")
</pallas_src>

<mosaic_0001>
module attributes {stable_mosaic.version = 11 : i64} {
  func.func @_encoder_fused_kernel(%arg0: i32, %arg1: memref<16x1xi32, #tpu.memory_space<vmem>>, %arg2: memref<2x32xf32, #tpu.memory_space<vmem>>, %arg3: memref<2x32xf32, #tpu.memory_space<vmem>>, %arg4: memref<64x128xf32, #tpu.memory_space<vmem>>, %arg5: memref<32x128xf32, #tpu.memory_space<vmem>>, %arg6: memref<1x128xf32, #tpu.memory_space<vmem>>, %arg7: memref<32x128xf32, #tpu.memory_space<vmem>>, %arg8: memref<1x128xf32, #tpu.memory_space<vmem>>, %arg9: memref<16x128xf32, #tpu.memory_space<vmem>>, %arg10: memref<2x32xf32, #tpu.memory_space<vmem>>, %arg11: memref<2x32xf32, #tpu.memory_space<vmem>>, %arg12: memref<16x128xf32, #tpu.memory_space<vmem>>, %arg13: memref<16x32xf32, #tpu.memory_space<vmem>>) attributes {dimension_semantics = [#tpu.dimension_semantics<arbitrary>], iteration_bounds = array<i64: 1>, scalar_prefetch = 0 : i64, scratch_operands = 2 : i64, tpu.core_type = #tpu.core_type<tc>, window_params = [{pipeline_mode = #tpu.pipeline_mode<synchronous>, transform_indices = @transform_0, window_bounds = array<i64: 16, 1>}, {pipeline_mode = #tpu.pipeline_mode<synchronous>, transform_indices = @transform_1, window_bounds = array<i64: 2, 32>}, {pipeline_mode = #tpu.pipeline_mode<synchronous>, transform_indices = @transform_2, window_bounds = array<i64: 2, 32>}, {pipeline_mode = #tpu.pipeline_mode<synchronous>, transform_indices = @transform_3, window_bounds = array<i64: 64, 128>}, {pipeline_mode = #tpu.pipeline_mode<synchronous>, transform_indices = @transform_4, window_bounds = array<i64: 32, 128>}, {pipeline_mode = #tpu.pipeline_mode<synchronous>, transform_indices = @transform_5, window_bounds = array<i64: 1, 128>}, {pipeline_mode = #tpu.pipeline_mode<synchronous>, transform_indices = @transform_6, window_bounds = array<i64: 32, 128>}, {pipeline_mode = #tpu.pipeline_mode<synchronous>, transform_indices = @transform_7, window_bounds = array<i64: 1, 128>}, {pipeline_mode = #tpu.pipeline_mode<synchronous>, transform_indices = @transform_8, window_bounds = array<i64: 16, 128>}, {pipeline_mode = #tpu.pipeline_mode<synchronous>, transform_indices = @transform_9, window_bounds = array<i64: 2, 32>}, {pipeline_mode = #tpu.pipeline_mode<synchronous>, transform_indices = @transform_10, window_bounds = array<i64: 2, 32>}]} {
    %0 = tpu.iota {dimensions = array<i32: 1>} : vector<1x64xi32>
    %c0 = arith.constant 0 : index
    %c0_0 = arith.constant 0 : index
    %1 = vector.load %arg1[%c0, %c0_0] : memref<16x1xi32, #tpu.memory_space<vmem>>, vector<16x1xi32>
    %2 = vector.broadcast %1 : vector<16x1xi32> to vector<16x64xi32>
    %3 = vector.broadcast %0 : vector<1x64xi32> to vector<16x64xi32>
    %4 = arith.cmpi eq, %2, %3 : vector<16x64xi32>
    %5 = arith.extui %4 : vector<16x64xi1> to vector<16x64xi32>
    %6 = arith.sitofp %5 : vector<16x64xi32> to vector<16x64xf32>
    %c0_1 = arith.constant 0 : index
    %c0_2 = arith.constant 0 : index
    %7 = vector.load %arg4[%c0_1, %c0_2] : memref<64x128xf32, #tpu.memory_space<vmem>>, vector<64x128xf32>
    %cst = arith.constant dense<0.000000e+00> : vector<16x128xf32>
    %8 = tpu.matmul %6, %7, %cst {dimension_numbers = #tpu.dot_dimension_numbers<[1], [0], [0], [1], [0, 0, 1, 1], [], []>} : vector<16x64xf32>, vector<64x128xf32>, vector<16x128xf32> -> vector<16x128xf32>
    %c0_3 = arith.constant 0 : index
    %c0_4 = arith.constant 0 : index
    %9 = vector.load %arg6[%c0_3, %c0_4] : memref<1x128xf32, #tpu.memory_space<vmem>>, vector<1x128xf32>
    %10 = vector.shape_cast %9 : vector<1x128xf32> to vector<1x128xf32>
    %11 = vector.broadcast %10 : vector<1x128xf32> to vector<16x128xf32>
    %12 = arith.addf %8, %11 : vector<16x128xf32>
    %c0_5 = arith.constant 0 : index
    %c0_6 = arith.constant 0 : index
    %13 = vector.load %arg12[%c0_5, %c0_6] : memref<16x128xf32, #tpu.memory_space<vmem>>, vector<16x128xf32>
    tpu.vector_store %arg12[%c0_5, %c0_6], %12 {strides = array<i32>} : memref<16x128xf32, #tpu.memory_space<vmem>>, vector<16x128xf32>,
    %c0_7 = arith.constant 0 : index
    %c0_8 = arith.constant 0 : index
    %14 = vector.load %arg5[%c0_7, %c0_8] : memref<32x128xf32, #tpu.memory_space<vmem>>, vector<32x128xf32>
    %c0_9 = arith.constant 0 : index
    %c0_10 = arith.constant 0 : index
    %15 = vector.load %arg2[%c0_9, %c0_10] : memref<2x32xf32, #tpu.memory_space<vmem>>, vector<2x32xf32>
    %c0_11 = arith.constant 0 : index
    %c0_12 = arith.constant 0 : index
    %16 = vector.load %arg3[%c0_11, %c0_12] : memref<2x32xf32, #tpu.memory_space<vmem>>, vector<2x32xf32>
    %c0_13 = arith.constant 0 : index
    %c0_14 = arith.constant 0 : index
    %17 = vector.load %arg12[%c0_13, %c0_14] : memref<16x128xf32, #tpu.memory_space<vmem>>, vector<2x128xf32>
    %cst_15 = arith.constant dense<0.000000e+00> : vector<2x128xf32>
    %18 = tpu.matmul %15, %14, %cst_15 {dimension_numbers = #tpu.dot_dimension_numbers<[1], [0], [0], [1], [0, 0, 1, 1], [], []>} : vector<2x32xf32>, vector<32x128xf32>, vector<2x128xf32> -> vector<2x128xf32>
    %19 = arith.addf %17, %18 : vector<2x128xf32>
    %20 = arith.negf %19 : vector<2x128xf32>
    %21 = math.exp %20 : vector<2x128xf32>
    %cst_16 = arith.constant 1.000000e+00 : f32
    %22 = vector.broadcast %cst_16 : f32 to vector<2x128xf32>
    %23 = arith.addf %22, %21 : vector<2x128xf32>
    %24 = arith.divf %22, %23 : vector<2x128xf32>
    %25 = vector.extract_strided_slice %19 {offsets = [0, 64], sizes = [2, 32], strides = [1, 1]} : vector<2x128xf32> to vector<2x32xf32>
    %26 = math.tanh %25 : vector<2x32xf32>
    %27 = vector.extract_strided_slice %24 {offsets = [0, 0], sizes = [2, 32], strides = [1, 1]} : vector<2x128xf32> to vector<2x32xf32>
    %28 = vector.extract_strided_slice %24 {offsets = [0, 32], sizes = [2, 32], strides = [1, 1]} : vector<2x128xf32> to vector<2x32xf32>
    %29 = vector.extract_strided_slice %24 {offsets = [0, 96], sizes = [2, 32], strides = [1, 1]} : vector<2x128xf32> to vector<2x32xf32>
    %30 = arith.mulf %28, %16 : vector<2x32xf32>
    %31 = arith.mulf %27, %26 : vector<2x32xf32>
    %32 = arith.addf %30, %31 : vector<2x32xf32>
    %33 = math.tanh %32 : vector<2x32xf32>
    %34 = arith.mulf %29, %33 : vector<2x32xf32>
    %c0_17 = arith.constant 0 : index
    %c0_18 = arith.constant 0 : index
    %35 = vector.load %arg13[%c0_17, %c0_18] : memref<16x32xf32, #tpu.memory_space<vmem>>, vector<2x32xf32>
    tpu.vector_store %arg13[%c0_17, %c0_18], %34 {strides = array<i32>} : memref<16x32xf32, #tpu.memory_space<vmem>>, vector<2x32xf32>,
    %c2 = arith.constant 2 : index
    %c0_19 = arith.constant 0 : index
    %36 = vector.load %arg12[%c2, %c0_19] : memref<16x128xf32, #tpu.memory_space<vmem>>, vector<2x128xf32>
    %cst_20 = arith.constant dense<0.000000e+00> : vector<2x128xf32>
    %37 = tpu.matmul %34, %14, %cst_20 {dimension_numbers = #tpu.dot_dimension_numbers<[1], [0], [0], [1], [0, 0, 1, 1], [], []>} : vector<2x32xf32>, vector<32x128xf32>, vector<2x128xf32> -> vector<2x128xf32>
    %38 = arith.addf %36, %37 : vector<2x128xf32>
    %39 = arith.negf %38 : vector<2x128xf32>
    %40 = math.exp %39 : vector<2x128xf32>
    %cst_21 = arith.constant 1.000000e+00 : f32
    %41 = vector.broadcast %cst_21 : f32 to vector<2x128xf32>
    %42 = arith.addf %41, %40 : vector<2x128xf32>
    %43 = arith.divf %41, %42 : vector<2x128xf32>
    %44 = vector.extract_strided_slice %38 {offsets = [0, 64], sizes = [2, 32], strides = [1, 1]} : vector<2x128xf32> to vector<2x32xf32>
    %45 = math.tanh %44 : vector<2x32xf32>
    %46 = vector.extract_strided_slice %43 {offsets = [0, 0], sizes = [2, 32], strides = [1, 1]} : vector<2x128xf32> to vector<2x32xf32>
    %47 = vector.extract_strided_slice %43 {offsets = [0, 32], sizes = [2, 32], strides = [1, 1]} : vector<2x128xf32> to vector<2x32xf32>
    %48 = vector.extract_strided_slice %43 {offsets = [0, 96], sizes = [2, 32], strides = [1, 1]} : vector<2x128xf32> to vector<2x32xf32>
    %49 = arith.mulf %47, %32 : vector<2x32xf32>
    %50 = arith.mulf %46, %45 : vector<2x32xf32>
    %51 = arith.addf %49, %50 : vector<2x32xf32>
    %52 = math.tanh %51 : vector<2x32xf32>
    %53 = arith.mulf %48, %52 : vector<2x32xf32>
    %c2_22 = arith.constant 2 : index
    %c0_23 = arith.constant 0 : index
    %54 = vector.load %arg13[%c2_22, %c0_23] : memref<16x32xf32, #tpu.memory_space<vmem>>, vector<2x32xf32>
    tpu.vector_store %arg13[%c2_22, %c0_23], %53 {strides = array<i32>} : memref<16x32xf32, #tpu.memory_space<vmem>>, vector<2x32xf32>,
    %c4 = arith.constant 4 : index
    %c0_24 = arith.constant 0 : index
    %55 = vector.load %arg12[%c4, %c0_24] : memref<16x128xf32, #tpu.memory_space<vmem>>, vector<2x128xf32>
    %cst_25 = arith.constant dense<0.000000e+00> : vector<2x128xf32>
    %56 = tpu.matmul %53, %14, %cst_25 {dimension_numbers = #tpu.dot_dimension_numbers<[1], [0], [0], [1], [0, 0, 1, 1], [], []>} : vector<2x32xf32>, vector<32x128xf32>, vector<2x128xf32> -> vector<2x128xf32>
    %57 = arith.addf %55, %56 : vector<2x128xf32>
    %58 = arith.negf %57 : vector<2x128xf32>
    %59 = math.exp %58 : vector<2x128xf32>
    %cst_26 = arith.constant 1.000000e+00 : f32
    %60 = vector.broadcast %cst_26 : f32 to vector<2x128xf32>
    %61 = arith.addf %60, %59 : vector<2x128xf32>
    %62 = arith.divf %60, %61 : vector<2x128xf32>
    %63 = vector.extract_strided_slice %57 {offsets = [0, 64], sizes = [2, 32], strides = [1, 1]} : vector<2x128xf32> to vector<2x32xf32>
    %64 = math.tanh %63 : vector<2x32xf32>
    %65 = vector.extract_strided_slice %62 {offsets = [0, 0], sizes = [2, 32], strides = [1, 1]} : vector<2x128xf32> to vector<2x32xf32>
    %66 = vector.extract_strided_slice %62 {offsets = [0, 32], sizes = [2, 32], strides = [1, 1]} : vector<2x128xf32> to vector<2x32xf32>
    %67 = vector.extract_strided_slice %62 {offsets = [0, 96], sizes = [2, 32], strides = [1, 1]} : vector<2x128xf32> to vector<2x32xf32>
    %68 = arith.mulf %66, %51 : vector<2x32xf32>
    %69 = arith.mulf %65, %64 : vector<2x32xf32>
    %70 = arith.addf %68, %69 : vector<2x32xf32>
    %71 = math.tanh %70 : vector<2x32xf32>
    %72 = arith.mulf %67, %71 : vector<2x32xf32>
    %c4_27 = arith.constant 4 : index
    %c0_28 = arith.constant 0 : index
    %73 = vector.load %arg13[%c4_27, %c0_28] : memref<16x32xf32, #tpu.memory_space<vmem>>, vector<2x32xf32>
    tpu.vector_store %arg13[%c4_27, %c0_28], %72 {strides = array<i32>} : memref<16x32xf32, #tpu.memory_space<vmem>>, vector<2x32xf32>,
    %c6 = arith.constant 6 : index
    %c0_29 = arith.constant 0 : index
    %74 = vector.load %arg12[%c6, %c0_29] : memref<16x128xf32, #tpu.memory_space<vmem>>, vector<2x128xf32>
    %cst_30 = arith.constant dense<0.000000e+00> : vector<2x128xf32>
    %75 = tpu.matmul %72, %14, %cst_30 {dimension_numbers = #tpu.dot_dimension_numbers<[1], [0], [0], [1], [0, 0, 1, 1], [], []>} : vector<2x32xf32>, vector<32x128xf32>, vector<2x128xf32> -> vector<2x128xf32>
    %76 = arith.addf %74, %75 : vector<2x128xf32>
    %77 = arith.negf %76 : vector<2x128xf32>
    %78 = math.exp %77 : vector<2x128xf32>
    %cst_31 = arith.constant 1.000000e+00 : f32
    %79 = vector.broadcast %cst_31 : f32 to vector<2x128xf32>
    %80 = arith.addf %79, %78 : vector<2x128xf32>
    %81 = arith.divf %79, %80 : vector<2x128xf32>
    %82 = vector.extract_strided_slice %76 {offsets = [0, 64], sizes = [2, 32], strides = [1, 1]} : vector<2x128xf32> to vector<2x32xf32>
    %83 = math.tanh %82 : vector<2x32xf32>
    %84 = vector.extract_strided_slice %81 {offsets = [0, 0], sizes = [2, 32], strides = [1, 1]} : vector<2x128xf32> to vector<2x32xf32>
    %85 = vector.extract_strided_slice %81 {offsets = [0, 32], sizes = [2, 32], strides = [1, 1]} : vector<2x128xf32> to vector<2x32xf32>
    %86 = vector.extract_strided_slice %81 {offsets = [0, 96], sizes = [2, 32], strides = [1, 1]} : vector<2x128xf32> to vector<2x32xf32>
    %87 = arith.mulf %85, %70 : vector<2x32xf32>
    %88 = arith.mulf %84, %83 : vector<2x32xf32>
    %89 = arith.addf %87, %88 : vector<2x32xf32>
    %90 = math.tanh %89 : vector<2x32xf32>
    %91 = arith.mulf %86, %90 : vector<2x32xf32>
    %c6_32 = arith.constant 6 : index
    %c0_33 = arith.constant 0 : index
    %92 = vector.load %arg13[%c6_32, %c0_33] : memref<16x32xf32, #tpu.memory_space<vmem>>, vector<2x32xf32>
    tpu.vector_store %arg13[%c6_32, %c0_33], %91 {strides = array<i32>} : memref<16x32xf32, #tpu.memory_space<vmem>>, vector<2x32xf32>,
    %c8 = arith.constant 8 : index
    %c0_34 = arith.constant 0 : index
    %93 = vector.load %arg12[%c8, %c0_34] : memref<16x128xf32, #tpu.memory_space<vmem>>, vector<2x128xf32>
    %cst_35 = arith.constant dense<0.000000e+00> : vector<2x128xf32>
    %94 = tpu.matmul %91, %14, %cst_35 {dimension_numbers = #tpu.dot_dimension_numbers<[1], [0], [0], [1], [0, 0, 1, 1], [], []>} : vector<2x32xf32>, vector<32x128xf32>, vector<2x128xf32> -> vector<2x128xf32>
    %95 = arith.addf %93, %94 : vector<2x128xf32>
    %96 = arith.negf %95 : vector<2x128xf32>
    %97 = math.exp %96 : vector<2x128xf32>
    %cst_36 = arith.constant 1.000000e+00 : f32
    %98 = vector.broadcast %cst_36 : f32 to vector<2x128xf32>
    %99 = arith.addf %98, %97 : vector<2x128xf32>
    %100 = arith.divf %98, %99 : vector<2x128xf32>
    %101 = vector.extract_strided_slice %95 {offsets = [0, 64], sizes = [2, 32], strides = [1, 1]} : vector<2x128xf32> to vector<2x32xf32>
    %102 = math.tanh %101 : vector<2x32xf32>
    %103 = vector.extract_strided_slice %100 {offsets = [0, 0], sizes = [2, 32], strides = [1, 1]} : vector<2x128xf32> to vector<2x32xf32>
    %104 = vector.extract_strided_slice %100 {offsets = [0, 32], sizes = [2, 32], strides = [1, 1]} : vector<2x128xf32> to vector<2x32xf32>
    %105 = vector.extract_strided_slice %100 {offsets = [0, 96], sizes = [2, 32], strides = [1, 1]} : vector<2x128xf32> to vector<2x32xf32>
    %106 = arith.mulf %104, %89 : vector<2x32xf32>
    %107 = arith.mulf %103, %102 : vector<2x32xf32>
    %108 = arith.addf %106, %107 : vector<2x32xf32>
    %109 = math.tanh %108 : vector<2x32xf32>
    %110 = arith.mulf %105, %109 : vector<2x32xf32>
    %c8_37 = arith.constant 8 : index
    %c0_38 = arith.constant 0 : index
    %111 = vector.load %arg13[%c8_37, %c0_38] : memref<16x32xf32, #tpu.memory_space<vmem>>, vector<2x32xf32>
    tpu.vector_store %arg13[%c8_37, %c0_38], %110 {strides = array<i32>} : memref<16x32xf32, #tpu.memory_space<vmem>>, vector<2x32xf32>,
    %c10 = arith.constant 10 : index
    %c0_39 = arith.constant 0 : index
    %112 = vector.load %arg12[%c10, %c0_39] : memref<16x128xf32, #tpu.memory_space<vmem>>, vector<2x128xf32>
    %cst_40 = arith.constant dense<0.000000e+00> : vector<2x128xf32>
    %113 = tpu.matmul %110, %14, %cst_40 {dimension_numbers = #tpu.dot_dimension_numbers<[1], [0], [0], [1], [0, 0, 1, 1], [], []>} : vector<2x32xf32>, vector<32x128xf32>, vector<2x128xf32> -> vector<2x128xf32>
    %114 = arith.addf %112, %113 : vector<2x128xf32>
    %115 = arith.negf %114 : vector<2x128xf32>
    %116 = math.exp %115 : vector<2x128xf32>
    %cst_41 = arith.constant 1.000000e+00 : f32
    %117 = vector.broadcast %cst_41 : f32 to vector<2x128xf32>
    %118 = arith.addf %117, %116 : vector<2x128xf32>
    %119 = arith.divf %117, %118 : vector<2x128xf32>
    %120 = vector.extract_strided_slice %114 {offsets = [0, 64], sizes = [2, 32], strides = [1, 1]} : vector<2x128xf32> to vector<2x32xf32>
    %121 = math.tanh %120 : vector<2x32xf32>
    %122 = vector.extract_strided_slice %119 {offsets = [0, 0], sizes = [2, 32], strides = [1, 1]} : vector<2x128xf32> to vector<2x32xf32>
    %123 = vector.extract_strided_slice %119 {offsets = [0, 32], sizes = [2, 32], strides = [1, 1]} : vector<2x128xf32> to vector<2x32xf32>
    %124 = vector.extract_strided_slice %119 {offsets = [0, 96], sizes = [2, 32], strides = [1, 1]} : vector<2x128xf32> to vector<2x32xf32>
    %125 = arith.mulf %123, %108 : vector<2x32xf32>
    %126 = arith.mulf %122, %121 : vector<2x32xf32>
    %127 = arith.addf %125, %126 : vector<2x32xf32>
    %128 = math.tanh %127 : vector<2x32xf32>
    %129 = arith.mulf %124, %128 : vector<2x32xf32>
    %c10_42 = arith.constant 10 : index
    %c0_43 = arith.constant 0 : index
    %130 = vector.load %arg13[%c10_42, %c0_43] : memref<16x32xf32, #tpu.memory_space<vmem>>, vector<2x32xf32>
    tpu.vector_store %arg13[%c10_42, %c0_43], %129 {strides = array<i32>} : memref<16x32xf32, #tpu.memory_space<vmem>>, vector<2x32xf32>,
    %c12 = arith.constant 12 : index
    %c0_44 = arith.constant 0 : index
    %131 = vector.load %arg12[%c12, %c0_44] : memref<16x128xf32, #tpu.memory_space<vmem>>, vector<2x128xf32>
    %cst_45 = arith.constant dense<0.000000e+00> : vector<2x128xf32>
    %132 = tpu.matmul %129, %14, %cst_45 {dimension_numbers = #tpu.dot_dimension_numbers<[1], [0], [0], [1], [0, 0, 1, 1], [], []>} : vector<2x32xf32>, vector<32x128xf32>, vector<2x128xf32> -> vector<2x128xf32>
    %133 = arith.addf %131, %132 : vector<2x128xf32>
    %134 = arith.negf %133 : vector<2x128xf32>
    %135 = math.exp %134 : vector<2x128xf32>
    %cst_46 = arith.constant 1.000000e+00 : f32
    %136 = vector.broadcast %cst_46 : f32 to vector<2x128xf32>
    %137 = arith.addf %136, %135 : vector<2x128xf32>
    %138 = arith.divf %136, %137 : vector<2x128xf32>
    %139 = vector.extract_strided_slice %133 {offsets = [0, 64], sizes = [2, 32], strides = [1, 1]} : vector<2x128xf32> to vector<2x32xf32>
    %140 = math.tanh %139 : vector<2x32xf32>
    %141 = vector.extract_strided_slice %138 {offsets = [0, 0], sizes = [2, 32], strides = [1, 1]} : vector<2x128xf32> to vector<2x32xf32>
    %142 = vector.extract_strided_slice %138 {offsets = [0, 32], sizes = [2, 32], strides = [1, 1]} : vector<2x128xf32> to vector<2x32xf32>
    %143 = vector.extract_strided_slice %138 {offsets = [0, 96], sizes = [2, 32], strides = [1, 1]} : vector<2x128xf32> to vector<2x32xf32>
    %144 = arith.mulf %142, %127 : vector<2x32xf32>
    %145 = arith.mulf %141, %140 : vector<2x32xf32>
    %146 = arith.addf %144, %145 : vector<2x32xf32>
    %147 = math.tanh %146 : vector<2x32xf32>
    %148 = arith.mulf %143, %147 : vector<2x32xf32>
    %c12_47 = arith.constant 12 : index
    %c0_48 = arith.constant 0 : index
    %149 = vector.load %arg13[%c12_47, %c0_48] : memref<16x32xf32, #tpu.memory_space<vmem>>, vector<2x32xf32>
    tpu.vector_store %arg13[%c12_47, %c0_48], %148 {strides = array<i32>} : memref<16x32xf32, #tpu.memory_space<vmem>>, vector<2x32xf32>,
    %c14 = arith.constant 14 : index
    %c0_49 = arith.constant 0 : index
    %150 = vector.load %arg12[%c14, %c0_49] : memref<16x128xf32, #tpu.memory_space<vmem>>, vector<2x128xf32>
    %cst_50 = arith.constant dense<0.000000e+00> : vector<2x128xf32>
    %151 = tpu.matmul %148, %14, %cst_50 {dimension_numbers = #tpu.dot_dimension_numbers<[1], [0], [0], [1], [0, 0, 1, 1], [], []>} : vector<2x32xf32>, vector<32x128xf32>, vector<2x128xf32> -> vector<2x128xf32>
    %152 = arith.addf %150, %151 : vector<2x128xf32>
    %153 = arith.negf %152 : vector<2x128xf32>
    %154 = math.exp %153 : vector<2x128xf32>
    %cst_51 = arith.constant 1.000000e+00 : f32
    %155 = vector.broadcast %cst_51 : f32 to vector<2x128xf32>
    %156 = arith.addf %155, %154 : vector<2x128xf32>
    %157 = arith.divf %155, %156 : vector<2x128xf32>
    %158 = vector.extract_strided_slice %152 {offsets = [0, 64], sizes = [2, 32], strides = [1, 1]} : vector<2x128xf32> to vector<2x32xf32>
    %159 = math.tanh %158 : vector<2x32xf32>
    %160 = vector.extract_strided_slice %157 {offsets = [0, 0], sizes = [2, 32], strides = [1, 1]} : vector<2x128xf32> to vector<2x32xf32>
    %161 = vector.extract_strided_slice %157 {offsets = [0, 32], sizes = [2, 32], strides = [1, 1]} : vector<2x128xf32> to vector<2x32xf32>
    %162 = vector.extract_strided_slice %157 {offsets = [0, 96], sizes = [2, 32], strides = [1, 1]} : vector<2x128xf32> to vector<2x32xf32>
    %163 = arith.mulf %161, %146 : vector<2x32xf32>
    %164 = arith.mulf %160, %159 : vector<2x32xf32>
    %165 = arith.addf %163, %164 : vector<2x32xf32>
    %166 = math.tanh %165 : vector<2x32xf32>
    %167 = arith.mulf %162, %166 : vector<2x32xf32>
    %c14_52 = arith.constant 14 : index
    %c0_53 = arith.constant 0 : index
    %168 = vector.load %arg13[%c14_52, %c0_53] : memref<16x32xf32, #tpu.memory_space<vmem>>, vector<2x32xf32>
    tpu.vector_store %arg13[%c14_52, %c0_53], %167 {strides = array<i32>} : memref<16x32xf32, #tpu.memory_space<vmem>>, vector<2x32xf32>,
    %c0_54 = arith.constant 0 : index
    %c0_55 = arith.constant 0 : index
    %169 = vector.load %arg13[%c0_54, %c0_55] : memref<16x32xf32, #tpu.memory_space<vmem>>, vector<16x32xf32>
    %c0_56 = arith.constant 0 : index
    %c0_57 = arith.constant 0 : index
    %170 = vector.load %arg7[%c0_56, %c0_57] : memref<32x128xf32, #tpu.memory_space<vmem>>, vector<32x128xf32>
    %cst_58 = arith.constant dense<0.000000e+00> : vector<16x128xf32>
    %171 = tpu.matmul %169, %170, %cst_58 {dimension_numbers = #tpu.dot_dimension_numbers<[1], [0], [0], [1], [0, 0, 1, 1], [], []>} : vector<16x32xf32>, vector<32x128xf32>, vector<16x128xf32> -> vector<16x128xf32>
    %c0_59 = arith.constant 0 : index
    %c0_60 = arith.constant 0 : index
    %172 = vector.load %arg8[%c0_59, %c0_60] : memref<1x128xf32, #tpu.memory_space<vmem>>, vector<1x128xf32>
    %173 = vector.shape_cast %172 : vector<1x128xf32> to vector<1x128xf32>
    %174 = vector.broadcast %173 : vector<1x128xf32> to vector<16x128xf32>
    %175 = arith.addf %171, %174 : vector<16x128xf32>
    %c0_61 = arith.constant 0 : index
    %c0_62 = arith.constant 0 : index
    %176 = vector.load %arg9[%c0_61, %c0_62] : memref<16x128xf32, #tpu.memory_space<vmem>>, vector<16x128xf32>
    tpu.vector_store %arg9[%c0_61, %c0_62], %175 {strides = array<i32>} : memref<16x128xf32, #tpu.memory_space<vmem>>, vector<16x128xf32>,
    %c0_63 = arith.constant 0 : index
    %c0_64 = arith.constant 0 : index
    %177 = vector.load %arg10[%c0_63, %c0_64] : memref<2x32xf32, #tpu.memory_space<vmem>>, vector<2x32xf32>
    tpu.vector_store %arg10[%c0_63, %c0_64], %167 {strides = array<i32>} : memref<2x32xf32, #tpu.memory_space<vmem>>, vector<2x32xf32>,
    %c0_65 = arith.constant 0 : index
    %c0_66 = arith.constant 0 : index
    %178 = vector.load %arg11[%c0_65, %c0_66] : memref<2x32xf32, #tpu.memory_space<vmem>>, vector<2x32xf32>
    tpu.vector_store %arg11[%c0_65, %c0_66], %165 {strides = array<i32>} : memref<2x32xf32, #tpu.memory_space<vmem>>, vector<2x32xf32>,
    return
  }
  func.func @transform_0(%arg0: i32) -> (i32, i32) {
    %c0_i32 = arith.constant 0 : i32
    %c0_i32_0 = arith.constant 0 : i32
    %c0_i32_1 = arith.constant 0 : i32
    return %c0_i32, %c0_i32_0 : i32, i32
  }
  func.func @transform_1(%arg0: i32) -> (i32, i32) {
    %c0_i32 = arith.constant 0 : i32
    %c0_i32_0 = arith.constant 0 : i32
    %c0_i32_1 = arith.constant 0 : i32
    return %c0_i32, %c0_i32_0 : i32, i32
  }
  func.func @transform_2(%arg0: i32) -> (i32, i32) {
    %c0_i32 = arith.constant 0 : i32
    %c0_i32_0 = arith.constant 0 : i32
    %c0_i32_1 = arith.constant 0 : i32
    return %c0_i32, %c0_i32_0 : i32, i32
  }
  func.func @transform_3(%arg0: i32) -> (i32, i32) {
    %c0_i32 = arith.constant 0 : i32
    %c0_i32_0 = arith.constant 0 : i32
    %c0_i32_1 = arith.constant 0 : i32
    return %c0_i32, %c0_i32_0 : i32, i32
  }
  func.func @transform_4(%arg0: i32) -> (i32, i32) {
    %c0_i32 = arith.constant 0 : i32
    %c0_i32_0 = arith.constant 0 : i32
    %c0_i32_1 = arith.constant 0 : i32
    return %c0_i32, %c0_i32_0 : i32, i32
  }
  func.func @transform_5(%arg0: i32) -> (i32, i32) {
    %c0_i32 = arith.constant 0 : i32
    %c0_i32_0 = arith.constant 0 : i32
    %c0_i32_1 = arith.constant 0 : i32
    return %c0_i32, %c0_i32_0 : i32, i32
  }
  func.func @transform_6(%arg0: i32) -> (i32, i32) {
    %c0_i32 = arith.constant 0 : i32
    %c0_i32_0 = arith.constant 0 : i32
    %c0_i32_1 = arith.constant 0 : i32
    return %c0_i32, %c0_i32_0 : i32, i32
  }
  func.func @transform_7(%arg0: i32) -> (i32, i32) {
    %c0_i32 = arith.constant 0 : i32
    %c0_i32_0 = arith.constant 0 : i32
    %c0_i32_1 = arith.constant 0 : i32
    return %c0_i32, %c0_i32_0 : i32, i32
  }
  func.func @transform_8(%arg0: i32) -> (i32, i32) {
    %c0_i32 = arith.constant 0 : i32
    %c0_i32_0 = arith.constant 0 : i32
    %c0_i32_1 = arith.constant 0 : i32
    return %c0_i32, %c0_i32_0 : i32, i32
  }
  func.func @transform_9(%arg0: i32) -> (i32, i32) {
    %c0_i32 = arith.constant 0 : i32
    %c0_i32_0 = arith.constant 0 : i32
    %c0_i32_1 = arith.constant 0 : i32
    return %c0_i32, %c0_i32_0 : i32, i32
  }
  func.func @transform_10(%arg0: i32) -> (i32, i32) {
    %c0_i32 = arith.constant 0 : i32
    %c0_i32_0 = arith.constant 0 : i32
    %c0_i32_1 = arith.constant 0 : i32
    return %c0_i32, %c0_i32_0 : i32, i32
  }
}

</mosaic_0001>

<llo_original>
// kernel: encoder_forward.1
$region0: #{encoder_forward.1}
  #allocation0 [shape = 'u32[]', space=smem, size = 0x4, offset = 0x4, fixed_abs, tag = 'smem constant byte address 0x4 - core index']
  #allocation1 [shape = 'u32[144,128]{1,0:T(1,128)}', space=vmem, size = 0x12000, scoped, tag = 'internal scratch']
  #allocation2 [shape = 'f32[16,128]{1,0:T(8,128)}', space=vmem, size = 0x2000, scoped, tag = 'scratch operand']
  #allocation3 [shape = 'f32[16,32]{1,0:T(8,128)}', space=vmem, size = 0x2000, scoped, tag = 'scratch operand']
  %s0 = inlined_call_operand.vmem [shape: s32[16,1], index: 0, kind: input, shape index: {}]
  %s1 = inlined_call_operand.vmem [shape: f32[2,32], index: 1, kind: input, shape index: {}]
  %s2 = inlined_call_operand.vmem [shape: f32[2,32], index: 2, kind: input, shape index: {}]
  %s3 = inlined_call_operand.hbm [shape: f32[64,128], index: 3, kind: input, shape index: {}]
  %s4 = inlined_call_operand.vmem [shape: f32[32,128], index: 4, kind: input, shape index: {}]
  %s5 = inlined_call_operand.vmem [shape: f32[1,128], index: 5, kind: input, shape index: {}]
  %s6 = inlined_call_operand.hbm [shape: f32[32,128], index: 6, kind: input, shape index: {}]
  %s7 = inlined_call_operand.vmem [shape: f32[1,128], index: 7, kind: input, shape index: {}]
  %s8 = inlined_call_operand.vmem [shape: f32[16,128], index: 8, kind: output, shape index: {0}]
  %s9 = inlined_call_operand.hbm [shape: f32[2,32], index: 9, kind: output, shape index: {1}]
  %s10 = inlined_call_operand.hbm [shape: f32[2,32], index: 10, kind: output, shape index: {2}]
  %11 = xla_tuple %s8, %s9, %s10
  %s12 = sld [smem:[#allocation0]]
  $region66: #{encoder_forward.1} parent=0
    _
  %s14 = ssub.s32 1, %s12
  %s15 = scalar_select 0, %s14, %s12
  $region1: #{encoder_forward.1} parent=0
    #allocation4 [shape = 'u8[32768]{0}', space=vmem, size = 0x8000, scoped, tag = 'input window, operand 3, single buffered']
    #allocation5 [shape = 's32[1]{0}', space=sflag, size = 0x4, scoped, tag = 'scoped memory for encoder_forward.1']
    #allocation6 [shape = 's32[1]{0}', space=sflag, size = 0x4, scoped, tag = 'scoped memory for encoder_forward.1']
    #allocation7 [shape = 'u8[16384]{0}', space=vmem, size = 0x4000, scoped, tag = 'input window, operand 6, single buffered']
    #allocation8 [shape = 's32[1]{0}', space=sflag, size = 0x4, scoped, tag = 'scoped memory for encoder_forward.1']
    #allocation9 [shape = 'u8[1024]{0}', space=vmem, size = 0x400, scoped, tag = 'output window, operand 1, single buffered']
    #allocation10 [shape = 'u8[1024]{0}', space=vmem, size = 0x400, scoped, tag = 'output window, operand 2, single buffered']
    #allocation11 [shape = 's32[1]{0}', space=sflag, size = 0x4, scoped, tag = 'scoped memory for encoder_forward.1']
    %16 = vsyncpa [#allocation5], 0
    %17 = vsyncpa [#allocation8], 0
    %18 = vsyncpa [#allocation6], 0
    %19 = vsyncpa [#allocation11], 0
    // Predicated region
    $region2: #{encoder_forward.1} parent=1 // pred_check
      _
    $region3: #{encoder_forward.1} parent=1 // pred_check_branch
      %21 = sbr.rel (0) target = $region5
    $region4: #{encoder_forward.1} parent=1 // pred_region
      _
    $region5: #{encoder_forward.1} parent=1 // pred_fallthru
      _
    // Predicated region
    $region6: #{encoder_forward.1} parent=1 // pred_check
      _
    $region7: #{encoder_forward.1} parent=1 // pred_check_branch
      %23 = sbr.rel (0) target = $region9
    $region8: #{encoder_forward.1} parent=1 // pred_region
      _
    $region9: #{encoder_forward.1} parent=1 // pred_fallthru
      _
    // Predicated region
    $region10: #{encoder_forward.1} parent=1 // pred_check
      _
    $region11: #{encoder_forward.1} parent=1 // pred_check_branch
      %25 = sbr.rel (0) target = $region13
    $region12: #{encoder_forward.1} parent=1 // pred_region
      _
    $region13: #{encoder_forward.1} parent=1 // pred_fallthru
      _
    // Predicated region
    $region14: #{encoder_forward.1} parent=1 // pred_check
      _
    $region15: #{encoder_forward.1} parent=1 // pred_check_branch
      %27 = sbr.rel (0) target = $region17
    $region16: #{encoder_forward.1} parent=1 // pred_region
      %s29 = ssub.s32 1024, 1024
      %30 = vsyncadd [#allocation5], %s29
      %s31 = sshll.u32 [#allocation4], 4
      %s32 = int_to_ptr.vmem [resolvable:$true] %s31
      %37 = dma.hbm_to_vmem [thread:$0]  %s3, 1024, %s32, [#allocation5], 128, 128, 8
    $region17: #{encoder_forward.1} parent=1 // pred_fallthru
      _
    // Predicated region
    $region18: #{encoder_forward.1} parent=1 // pred_check
      _
    $region19: #{encoder_forward.1} parent=1 // pred_check_branch
      %39 = sbr.rel (0) target = $region21
    $region20: #{encoder_forward.1} parent=1 // pred_region
      _
    $region21: #{encoder_forward.1} parent=1 // pred_fallthru
      _
    // Predicated region
    $region22: #{encoder_forward.1} parent=1 // pred_check
      _
    $region23: #{encoder_forward.1} parent=1 // pred_check_branch
      %41 = sbr.rel (0) target = $region25
    $region24: #{encoder_forward.1} parent=1 // pred_region
      _
    $region25: #{encoder_forward.1} parent=1 // pred_fallthru
      _
    // Predicated region
    $region26: #{encoder_forward.1} parent=1 // pred_check
      _
    $region27: #{encoder_forward.1} parent=1 // pred_check_branch
      %43 = sbr.rel (0) target = $region29
    $region28: #{encoder_forward.1} parent=1 // pred_region
      %s45 = ssub.s32 512, 512
      %46 = vsyncadd [#allocation8], %s45
      %s47 = sshll.u32 [#allocation7], 4
      %s48 = int_to_ptr.vmem [resolvable:$true] %s47
      %53 = dma.hbm_to_vmem [thread:$0]  %s6, 512, %s48, [#allocation8], 128, 128, 8
    $region29: #{encoder_forward.1} parent=1 // pred_fallthru
      _
    // Predicated region
    $region30: #{encoder_forward.1} parent=1 // pred_check
      _
    $region31: #{encoder_forward.1} parent=1 // pred_check_branch
      %55 = sbr.rel (0) target = $region33
    $region32: #{encoder_forward.1} parent=1 // pred_region
      _
    $region33: #{encoder_forward.1} parent=1 // pred_fallthru
      _
    // Predicated region
    $region34: #{encoder_forward.1} parent=1 // pred_check
      _
    $region35: #{encoder_forward.1} parent=1 // pred_check_branch
      %57 = sbr.rel (0) target = $region37
    $region36: #{encoder_forward.1} parent=1 // pred_region
      %58 = dma.done [#allocation5], 1024
    $region37: #{encoder_forward.1} parent=1 // pred_fallthru
      _
    // Predicated region
    $region38: #{encoder_forward.1} parent=1 // pred_check
      _
    $region39: #{encoder_forward.1} parent=1 // pred_check_branch
      %60 = sbr.rel (0) target = $region41
    $region40: #{encoder_forward.1} parent=1 // pred_region
      %61 = dma.done [#allocation8], 512
    $region41: #{encoder_forward.1} parent=1 // pred_fallthru
      _
    %v62 = vlaneseq
    %v63 = vand.u32 %v62, 127
    %v64 = vld [vmem:[%s0] sm:$0xff]
    %v65 = vld [vmem:[%s0 + $0x8] sm:$0xff]
    %66 = vset.pattern.permute.xlu0 0
    %67 = vperm.xlu0 %66, %v64
    %v68 = vpop.permute.xlu0 %67
    %69 = vset.pattern.permute.xlu0 0
    %70 = vperm.xlu0 %69, %v65
    %v71 = vpop.permute.xlu0 %70
    %vm72 = vcmp.eq.s32.totalorder %v68, %v63
    %vm73 = vcmp.eq.s32.totalorder %v71, %v63
    %v74 = vsel %vm72, 1, 0
    %v75 = vsel %vm73, 1, 0
    %v76 = vcvt.s32.f32 %v74
    %v77 = vcvt.s32.f32 %v75
    %v78 = vld [vmem:[#allocation4] sm:$0xff]
    %v79 = vld [vmem:[#allocation4 + $0x8] sm:$0xff]
    %v80 = vld [vmem:[#allocation4 + $0x10] sm:$0xff]
    %v81 = vld [vmem:[#allocation4 + $0x18] sm:$0xff]
    %v82 = vld [vmem:[#allocation4 + $0x20] sm:$0xff]
    %v83 = vld [vmem:[#allocation4 + $0x28] sm:$0xff]
    %v84 = vld [vmem:[#allocation4 + $0x30] sm:$0xff]
    %v85 = vld [vmem:[#allocation4 + $0x38] sm:$0xff]
    %v86 = vld [vmem:[%s5] sm:$0x1]
    %v88 = vlaneseq
    %v89 = vshrl.u32 %v88, 7
    %v90 = vsub.s32 0, %v89
    %v91 = vrot.slane %v86, %v90
    %vm93 = vcmask 523264
    %v95 = vsel %vm93, %v76, 0
    %v98 = vsel %vm93, %v77, 0
    %100 = vmatprep.subr.mxu0 0.0
    %101 = vmatpush1.msra.mxu0 %v78
    %102 = vmatprep.subr.mxu0 0.0
    %103 = vmatpush1.msra.mxu0 %v79
    %104 = vmatprep.subr.mxu0 0.0
    %105 = vmatpush1.msra.mxu0 %v80
    %106 = vmatprep.subr.mxu0 0.0
    %107 = vmatpush1.msra.mxu0 %v81
    %108 = vmatprep.subr.mxu0 0.0
    %109 = vmatpush1.msra.mxu0 %v82
    %110 = vmatprep.subr.mxu0 0.0
    %111 = vmatpush1.msra.mxu0 %v83
    %112 = vmatprep.subr.mxu0 0.0
    %113 = vmatpush1.msra.mxu0 %v84
    %114 = vmatprep.subr.mxu0 0.0
    %115 = vmatpush1.msra.mxu0 %v85
    %116 = vmatprep.subr.mxu0 0.0
    %117 = vmatpush1.msra.mxu0 0.0
    %118 = vmatprep.subr.mxu0 0.0
    %119 = vmatpush1.msra.mxu0 0.0
    %120 = vmatprep.subr.mxu0 0.0
    %121 = vmatpush1.msra.mxu0 0.0
    %122 = vmatprep.subr.mxu0 0.0
    %123 = vmatpush1.msra.mxu0 0.0
    %124 = vmatprep.subr.mxu0 0.0
    %125 = vmatpush1.msra.mxu0 0.0
    %126 = vmatprep.subr.mxu0 0.0
    %127 = vmatpush1.msra.mxu0 0.0
    %128 = vmatprep.subr.mxu0 0.0
    %129 = vmatpush1.msra.mxu0 0.0
    %130 = vmatprep.subr.mxu0 0.0
    %131 = vmatpush1.msra.mxu0 0.0
    %132 = vmatprep.subr.mxu0 0.0
    %133 = vmatpush1.msra.mxu0 0.0
    %134 = vmatprep.subr.mxu0 0.0
    %135 = vmatpush1.msra.mxu0 0.0
    %136 = vmatprep.subr.mxu0 0.0
    %137 = vmatpush1.msra.mxu0 0.0
    %138 = vmatprep.subr.mxu0 0.0
    %139 = vmatpush1.msra.mxu0 0.0
    %140 = vmatprep.subr.mxu0 0.0
    %141 = vmatpush1.msra.mxu0 0.0
    %142 = vmatprep.subr.mxu0 0.0
    %143 = vmatpush1.msra.mxu0 0.0
    %144 = vmatprep.subr.mxu0 0.0
    %145 = vmatpush1.msra.mxu0 0.0
    %146 = vmatprep.subr.mxu0 0.0
    %147 = vmatpush1.msra.mxu0 0.0
    %148 = vmatprep.subr.mxu0 0.0
    %149 = vmatpush1.msra.mxu0 0.0
    %150 = vmatprep.subr.mxu0 0.0
    %151 = vmatpush1.msra.mxu0 0.0
    %152 = vmatprep.subr.mxu0 0.0
    %153 = vmatpush1.msra.mxu0 0.0
    %154 = vmatprep.subr.mxu0 0.0
    %155 = vmatpush1.msra.mxu0 0.0
    %156 = vmatprep.subr.mxu0 0.0
    %157 = vmatpush1.msra.mxu0 0.0
    %158 = vmatprep.subr.mxu0 0.0
    %159 = vmatpush1.msra.mxu0 0.0
    %160 = vmatprep.subr.mxu0 0.0
    %161 = vmatpush1.msra.mxu0 0.0
    %162 = vmatprep.subr.mxu0 0.0
    %163 = vmatpush1.msra.mxu0 0.0
    %164 = vmatprep.mubr.f32.mxu0 0.0
    %165 = vmatmul.mubr.f32.gmra.mrb[0].mxu0 %v95
    %v166 = vpop.f32.mrb[0].mxu0
    %v167 = vadd.f32 %v91, %v166
    %v168 = vpop.f32.mrb[0].mxu0
    %169 = vmatprep.mubr.f32.mxu0 0.0
    %170 = vmatmul.mubr.f32.gmra.mrb[0].mxu0 %v98
    %v171 = vpop.f32.mrb[0].mxu0
    %v172 = vadd.f32 %v91, %v171
    %v173 = vpop.f32.mrb[0].mxu0
    %174 = vdwg.mxu0
    %175 = vst [vmem:[#allocation2] sm:$0xff] %v167
    %176 = vst [vmem:[#allocation2 + $0x8] sm:$0xff] %v172
    %v177 = vld [vmem:[%s4] sm:$0xff]
    %v178 = vld [vmem:[%s4 + $0x8] sm:$0xff]
    %v179 = vld [vmem:[%s4 + $0x10] sm:$0xff]
    %v180 = vld [vmem:[%s4 + $0x18] sm:$0xff]
    %v181 = vld [vmem:[%s1] sm:$0x3]
    %v182 = vld [vmem:[%s2] sm:$0x3]
    %v183 = vld [vmem:[#allocation2] sm:$0x3]
    %vm184 = vcmask 261120
    %v186 = vsel %vm184, %v181, 0
    %188 = vmatprep.subr.mxu0 0.0
    %189 = vmatpush1.msra.mxu0 %v177
    %190 = vmatprep.subr.mxu0 0.0
    %191 = vmatpush1.msra.mxu0 %v178
    %192 = vmatprep.subr.mxu0 0.0
    %193 = vmatpush1.msra.mxu0 %v179
    %194 = vmatprep.subr.mxu0 0.0
    %195 = vmatpush1.msra.mxu0 %v180
    %196 = vmatprep.subr.mxu0 0.0
    %197 = vmatpush1.msra.mxu0 0.0
    %198 = vmatprep.subr.mxu0 0.0
    %199 = vmatpush1.msra.mxu0 0.0
    %200 = vmatprep.subr.mxu0 0.0
    %201 = vmatpush1.msra.mxu0 0.0
    %202 = vmatprep.subr.mxu0 0.0
    %203 = vmatpush1.msra.mxu0 0.0
    %204 = vmatprep.subr.mxu0 0.0
    %205 = vmatpush1.msra.mxu0 0.0
    %206 = vmatprep.subr.mxu0 0.0
    %207 = vmatpush1.msra.mxu0 0.0
    %208 = vmatprep.subr.mxu0 0.0
    %209 = vmatpush1.msra.mxu0 0.0
    %210 = vmatprep.subr.mxu0 0.0
    %211 = vmatpush1.msra.mxu0 0.0
    %212 = vmatprep.subr.mxu0 0.0
    %213 = vmatpush1.msra.mxu0 0.0
    %214 = vmatprep.subr.mxu0 0.0
    %215 = vmatpush1.msra.mxu0 0.0
    %216 = vmatprep.subr.mxu0 0.0
    %217 = vmatpush1.msra.mxu0 0.0
    %218 = vmatprep.subr.mxu0 0.0
    %219 = vmatpush1.msra.mxu0 0.0
    %220 = vmatprep.subr.mxu0 0.0
    %221 = vmatpush1.msra.mxu0 0.0
    %222 = vmatprep.subr.mxu0 0.0
    %223 = vmatpush1.msra.mxu0 0.0
    %224 = vmatprep.subr.mxu0 0.0
    %225 = vmatpush1.msra.mxu0 0.0
    %226 = vmatprep.subr.mxu0 0.0
    %227 = vmatpush1.msra.mxu0 0.0
    %228 = vmatprep.subr.mxu0 0.0
    %229 = vmatpush1.msra.mxu0 0.0
    %230 = vmatprep.subr.mxu0 0.0
    %231 = vmatpush1.msra.mxu0 0.0
    %232 = vmatprep.subr.mxu0 0.0
    %233 = vmatpush1.msra.mxu0 0.0
    %234 = vmatprep.subr.mxu0 0.0
    %235 = vmatpush1.msra.mxu0 0.0
    %236 = vmatprep.subr.mxu0 0.0
    %237 = vmatpush1.msra.mxu0 0.0
    %238 = vmatprep.subr.mxu0 0.0
    %239 = vmatpush1.msra.mxu0 0.0
    %240 = vmatprep.subr.mxu0 0.0
    %241 = vmatpush1.msra.mxu0 0.0
    %242 = vmatprep.subr.mxu0 0.0
    %243 = vmatpush1.msra.mxu0 0.0
    %244 = vmatprep.subr.mxu0 0.0
    %245 = vmatpush1.msra.mxu0 0.0
    %246 = vmatprep.subr.mxu0 0.0
    %247 = vmatpush1.msra.mxu0 0.0
    %248 = vmatprep.subr.mxu0 0.0
    %249 = vmatpush1.msra.mxu0 0.0
    %250 = vmatprep.subr.mxu0 0.0
    %251 = vmatpush1.msra.mxu0 0.0
    %252 = vmatprep.mubr.f32.mxu0 0.0
    %253 = vmatmul.mubr.f32.gmra.mrb[0].mxu0 %v186
    %v254 = vpop.f32.mrb[0].mxu0
    %v255 = vadd.f32 0.0, %v254
    %v256 = vpop.f32.mrb[0].mxu0
    %257 = vdwg.mxu0
    %v258 = vadd.f32 %v183, %v255
    %v259 = vxor.u32 %v258, 2147483648
    %v260 = vmul.f32 %v259, 1.442695
    %v261 = vpow.pop %v260
    %v262 = vadd.f32 %v261, 1.0
    %v263 = vrcp.pop %v262
    %v264 = vmul.f32 1.0, %v263
    %v265 = vtanh.pop %v258
    %267 = vrot.lane.b32.xlu0 %v182, 32
    %v268 = vpop.permute.xlu0 %267
    %v270 = vmul.f32 %v264, %v268
    %272 = vrot.lane.b32.xlu0 %v265, 64
    %v273 = vpop.permute.xlu0 %272
    %v275 = vmul.f32 %v264, %v273
    %277 = vrot.lane.b32.xlu0 %v275, 32
    %v278 = vpop.permute.xlu0 %277
    %v280 = vadd.f32 %v270, %v278
    %v281 = vtanh.pop %v280
    %283 = vrot.lane.b32.xlu0 %v281, 64
    %v284 = vpop.permute.xlu0 %283
    %v286 = vmul.f32 %v264, %v284
    %288 = vrot.lane.b32.xlu0 %v286, 32
    %v289 = vpop.permute.xlu0 %288
    %vm291 = vcmask 254976
    %292 = vst.msk [vmem:[#allocation3] sm:$0x3] %vm291, %v289
    %v293 = vld [vmem:[#allocation2 + $0x2] sm:$0x3]
    %v294 = vsel %vm184, %v289, 0
    %296 = vmatprep.subr.mxu0 0.0
    %297 = vmatpush1.msra.mxu0 %v177
    %298 = vmatprep.subr.mxu0 0.0
    %299 = vmatpush1.msra.mxu0 %v178
    %300 = vmatprep.subr.mxu0 0.0
    %301 = vmatpush1.msra.mxu0 %v179
    %302 = vmatprep.subr.mxu0 0.0
    %303 = vmatpush1.msra.mxu0 %v180
    %304 = vmatprep.subr.mxu0 0.0
    %305 = vmatpush1.msra.mxu0 0.0
    %306 = vmatprep.subr.mxu0 0.0
    %307 = vmatpush1.msra.mxu0 0.0
    %308 = vmatprep.subr.mxu0 0.0
    %309 = vmatpush1.msra.mxu0 0.0
    %310 = vmatprep.subr.mxu0 0.0
    %311 = vmatpush1.msra.mxu0 0.0
    %312 = vmatprep.subr.mxu0 0.0
    %313 = vmatpush1.msra.mxu0 0.0
    %314 = vmatprep.subr.mxu0 0.0
    %315 = vmatpush1.msra.mxu0 0.0
    %316 = vmatprep.subr.mxu0 0.0
    %317 = vmatpush1.msra.mxu0 0.0
    %318 = vmatprep.subr.mxu0 0.0
    %319 = vmatpush1.msra.mxu0 0.0
    %320 = vmatprep.subr.mxu0 0.0
    %321 = vmatpush1.msra.mxu0 0.0
    %322 = vmatprep.subr.mxu0 0.0
    %323 = vmatpush1.msra.mxu0 0.0
    %324 = vmatprep.subr.mxu0 0.0
    %325 = vmatpush1.msra.mxu0 0.0
    %326 = vmatprep.subr.mxu0 0.0
    %327 = vmatpush1.msra.mxu0 0.0
    %328 = vmatprep.subr.mxu0 0.0
    %329 = vmatpush1.msra.mxu0 0.0
    %330 = vmatprep.subr.mxu0 0.0
    %331 = vmatpush1.msra.mxu0 0.0
    %332 = vmatprep.subr.mxu0 0.0
    %333 = vmatpush1.msra.mxu0 0.0
    %334 = vmatprep.subr.mxu0 0.0
    %335 = vmatpush1.msra.mxu0 0.0
    %336 = vmatprep.subr.mxu0 0.0
    %337 = vmatpush1.msra.mxu0 0.0
    %338 = vmatprep.subr.mxu0 0.0
    %339 = vmatpush1.msra.mxu0 0.0
    %340 = vmatprep.subr.mxu0 0.0
    %341 = vmatpush1.msra.mxu0 0.0
    %342 = vmatprep.subr.mxu0 0.0
    %343 = vmatpush1.msra.mxu0 0.0
    %344 = vmatprep.subr.mxu0 0.0
    %345 = vmatpush1.msra.mxu0 0.0
    %346 = vmatprep.subr.mxu0 0.0
    %347 = vmatpush1.msra.mxu0 0.0
    %348 = vmatprep.subr.mxu0 0.0
    %349 = vmatpush1.msra.mxu0 0.0
    %350 = vmatprep.subr.mxu0 0.0
    %351 = vmatpush1.msra.mxu0 0.0
    %352 = vmatprep.subr.mxu0 0.0
    %353 = vmatpush1.msra.mxu0 0.0
    %354 = vmatprep.subr.mxu0 0.0
    %355 = vmatpush1.msra.mxu0 0.0
    %356 = vmatprep.subr.mxu0 0.0
    %357 = vmatpush1.msra.mxu0 0.0
    %358 = vmatprep.subr.mxu0 0.0
    %359 = vmatpush1.msra.mxu0 0.0
    %360 = vmatprep.mubr.f32.mxu0 0.0
    %361 = vmatmul.mubr.f32.gmra.mrb[0].mxu0 %v294
    %v362 = vpop.f32.mrb[0].mxu0
    %v363 = vadd.f32 0.0, %v362
    %v364 = vpop.f32.mrb[0].mxu0
    %365 = vdwg.mxu0
    %v366 = vadd.f32 %v293, %v363
    %v367 = vxor.u32 %v366, 2147483648
    %v368 = vmul.f32 %v367, 1.442695
    %v369 = vpow.pop %v368
    %v370 = vadd.f32 %v369, 1.0
    %v371 = vrcp.pop %v370
    %v372 = vmul.f32 1.0, %v371
    %v373 = vtanh.pop %v366
    %v374 = vmul.f32 %v372, %v280
    %376 = vrot.lane.b32.xlu0 %v373, 64
    %v377 = vpop.permute.xlu0 %376
    %v379 = vmul.f32 %v372, %v377
    %381 = vrot.lane.b32.xlu0 %v379, 32
    %v382 = vpop.permute.xlu0 %381
    %v384 = vadd.f32 %v374, %v382
    %v385 = vtanh.pop %v384
    %387 = vrot.lane.b32.xlu0 %v385, 64
    %v388 = vpop.permute.xlu0 %387
    %v390 = vmul.f32 %v372, %v388
    %392 = vrot.lane.b32.xlu0 %v390, 32
    %v393 = vpop.permute.xlu0 %392
    %395 = vst.msk [vmem:[#allocation3 + $0x2] sm:$0x3] %vm291, %v393
    %v396 = vld [vmem:[#allocation2 + $0x4] sm:$0x3]
    %v397 = vsel %vm184, %v393, 0
    %399 = vmatprep.subr.mxu0 0.0
    %400 = vmatpush1.msra.mxu0 %v177
    %401 = vmatprep.subr.mxu0 0.0
    %402 = vmatpush1.msra.mxu0 %v178
    %403 = vmatprep.subr.mxu0 0.0
    %404 = vmatpush1.msra.mxu0 %v179
    %405 = vmatprep.subr.mxu0 0.0
    %406 = vmatpush1.msra.mxu0 %v180
    %407 = vmatprep.subr.mxu0 0.0
    %408 = vmatpush1.msra.mxu0 0.0
    %409 = vmatprep.subr.mxu0 0.0
    %410 = vmatpush1.msra.mxu0 0.0
    %411 = vmatprep.subr.mxu0 0.0
    %412 = vmatpush1.msra.mxu0 0.0
    %413 = vmatprep.subr.mxu0 0.0
    %414 = vmatpush1.msra.mxu0 0.0
    %415 = vmatprep.subr.mxu0 0.0
    %416 = vmatpush1.msra.mxu0 0.0
    %417 = vmatprep.subr.mxu0 0.0
    %418 = vmatpush1.msra.mxu0 0.0
    %419 = vmatprep.subr.mxu0 0.0
    %420 = vmatpush1.msra.mxu0 0.0
    %421 = vmatprep.subr.mxu0 0.0
    %422 = vmatpush1.msra.mxu0 0.0
    %423 = vmatprep.subr.mxu0 0.0
    %424 = vmatpush1.msra.mxu0 0.0
    %425 = vmatprep.subr.mxu0 0.0
    %426 = vmatpush1.msra.mxu0 0.0
    %427 = vmatprep.subr.mxu0 0.0
    %428 = vmatpush1.msra.mxu0 0.0
    %429 = vmatprep.subr.mxu0 0.0
    %430 = vmatpush1.msra.mxu0 0.0
    %431 = vmatprep.subr.mxu0 0.0
    %432 = vmatpush1.msra.mxu0 0.0
    %433 = vmatprep.subr.mxu0 0.0
    %434 = vmatpush1.msra.mxu0 0.0
    %435 = vmatprep.subr.mxu0 0.0
    %436 = vmatpush1.msra.mxu0 0.0
    %437 = vmatprep.subr.mxu0 0.0
    %438 = vmatpush1.msra.mxu0 0.0
    %439 = vmatprep.subr.mxu0 0.0
    %440 = vmatpush1.msra.mxu0 0.0
    %441 = vmatprep.subr.mxu0 0.0
    %442 = vmatpush1.msra.mxu0 0.0
    %443 = vmatprep.subr.mxu0 0.0
    %444 = vmatpush1.msra.mxu0 0.0
    %445 = vmatprep.subr.mxu0 0.0
    %446 = vmatpush1.msra.mxu0 0.0
    %447 = vmatprep.subr.mxu0 0.0
    %448 = vmatpush1.msra.mxu0 0.0
    %449 = vmatprep.subr.mxu0 0.0
    %450 = vmatpush1.msra.mxu0 0.0
    %451 = vmatprep.subr.mxu0 0.0
    %452 = vmatpush1.msra.mxu0 0.0
    %453 = vmatprep.subr.mxu0 0.0
    %454 = vmatpush1.msra.mxu0 0.0
    %455 = vmatprep.subr.mxu0 0.0
    %456 = vmatpush1.msra.mxu0 0.0
    %457 = vmatprep.subr.mxu0 0.0
    %458 = vmatpush1.msra.mxu0 0.0
    %459 = vmatprep.subr.mxu0 0.0
    %460 = vmatpush1.msra.mxu0 0.0
    %461 = vmatprep.subr.mxu0 0.0
    %462 = vmatpush1.msra.mxu0 0.0
    %463 = vmatprep.mubr.f32.mxu0 0.0
    %464 = vmatmul.mubr.f32.gmra.mrb[0].mxu0 %v397
    %v465 = vpop.f32.mrb[0].mxu0
    %v466 = vadd.f32 0.0, %v465
    %v467 = vpop.f32.mrb[0].mxu0
    %468 = vdwg.mxu0
    %v469 = vadd.f32 %v396, %v466
    %v470 = vxor.u32 %v469, 2147483648
    %v471 = vmul.f32 %v470, 1.442695
    %v472 = vpow.pop %v471
    %v473 = vadd.f32 %v472, 1.0
    %v474 = vrcp.pop %v473
    %v475 = vmul.f32 1.0, %v474
    %v476 = vtanh.pop %v469
    %v477 = vmul.f32 %v475, %v384
    %479 = vrot.lane.b32.xlu0 %v476, 64
    %v480 = vpop.permute.xlu0 %479
    %v482 = vmul.f32 %v475, %v480
    %484 = vrot.lane.b32.xlu0 %v482, 32
    %v485 = vpop.permute.xlu0 %484
    %v487 = vadd.f32 %v477, %v485
    %v488 = vtanh.pop %v487
    %490 = vrot.lane.b32.xlu0 %v488, 64
    %v491 = vpop.permute.xlu0 %490
    %v493 = vmul.f32 %v475, %v491
    %495 = vrot.lane.b32.xlu0 %v493, 32
    %v496 = vpop.permute.xlu0 %495
    %498 = vst.msk [vmem:[#allocation3 + $0x4] sm:$0x3] %vm291, %v496
    %v499 = vld [vmem:[#allocation2 + $0x6] sm:$0x3]
    %v500 = vsel %vm184, %v496, 0
    %502 = vmatprep.subr.mxu0 0.0
    %503 = vmatpush1.msra.mxu0 %v177
    %504 = vmatprep.subr.mxu0 0.0
    %505 = vmatpush1.msra.mxu0 %v178
    %506 = vmatprep.subr.mxu0 0.0
    %507 = vmatpush1.msra.mxu0 %v179
    %508 = vmatprep.subr.mxu0 0.0
    %509 = vmatpush1.msra.mxu0 %v180
    %510 = vmatprep.subr.mxu0 0.0
    %511 = vmatpush1.msra.mxu0 0.0
    %512 = vmatprep.subr.mxu0 0.0
    %513 = vmatpush1.msra.mxu0 0.0
    %514 = vmatprep.subr.mxu0 0.0
    %515 = vmatpush1.msra.mxu0 0.0
    %516 = vmatprep.subr.mxu0 0.0
    %517 = vmatpush1.msra.mxu0 0.0
    %518 = vmatprep.subr.mxu0 0.0
    %519 = vmatpush1.msra.mxu0 0.0
    %520 = vmatprep.subr.mxu0 0.0
    %521 = vmatpush1.msra.mxu0 0.0
    %522 = vmatprep.subr.mxu0 0.0
    %523 = vmatpush1.msra.mxu0 0.0
    %524 = vmatprep.subr.mxu0 0.0
    %525 = vmatpush1.msra.mxu0 0.0
    %526 = vmatprep.subr.mxu0 0.0
    %527 = vmatpush1.msra.mxu0 0.0
    %528 = vmatprep.subr.mxu0 0.0
    %529 = vmatpush1.msra.mxu0 0.0
    %530 = vmatprep.subr.mxu0 0.0
    %531 = vmatpush1.msra.mxu0 0.0
    %532 = vmatprep.subr.mxu0 0.0
    %533 = vmatpush1.msra.mxu0 0.0
    %534 = vmatprep.subr.mxu0 0.0
    %535 = vmatpush1.msra.mxu0 0.0
    %536 = vmatprep.subr.mxu0 0.0
    %537 = vmatpush1.msra.mxu0 0.0
    %538 = vmatprep.subr.mxu0 0.0
    %539 = vmatpush1.msra.mxu0 0.0
    %540 = vmatprep.subr.mxu0 0.0
    %541 = vmatpush1.msra.mxu0 0.0
    %542 = vmatprep.subr.mxu0 0.0
    %543 = vmatpush1.msra.mxu0 0.0
    %544 = vmatprep.subr.mxu0 0.0
    %545 = vmatpush1.msra.mxu0 0.0
    %546 = vmatprep.subr.mxu0 0.0
    %547 = vmatpush1.msra.mxu0 0.0
    %548 = vmatprep.subr.mxu0 0.0
    %549 = vmatpush1.msra.mxu0 0.0
    %550 = vmatprep.subr.mxu0 0.0
    %551 = vmatpush1.msra.mxu0 0.0
    %552 = vmatprep.subr.mxu0 0.0
    %553 = vmatpush1.msra.mxu0 0.0
    %554 = vmatprep.subr.mxu0 0.0
    %555 = vmatpush1.msra.mxu0 0.0
    %556 = vmatprep.subr.mxu0 0.0
    %557 = vmatpush1.msra.mxu0 0.0
    %558 = vmatprep.subr.mxu0 0.0
    %559 = vmatpush1.msra.mxu0 0.0
    %560 = vmatprep.subr.mxu0 0.0
    %561 = vmatpush1.msra.mxu0 0.0
    %562 = vmatprep.subr.mxu0 0.0
    %563 = vmatpush1.msra.mxu0 0.0
    %564 = vmatprep.subr.mxu0 0.0
    %565 = vmatpush1.msra.mxu0 0.0
    %566 = vmatprep.mubr.f32.mxu0 0.0
    %567 = vmatmul.mubr.f32.gmra.mrb[0].mxu0 %v500
    %v568 = vpop.f32.mrb[0].mxu0
    %v569 = vadd.f32 0.0, %v568
    %v570 = vpop.f32.mrb[0].mxu0
    %571 = vdwg.mxu0
    %v572 = vadd.f32 %v499, %v569
    %v573 = vxor.u32 %v572, 2147483648
    %v574 = vmul.f32 %v573, 1.442695
    %v575 = vpow.pop %v574
    %v576 = vadd.f32 %v575, 1.0
    %v577 = vrcp.pop %v576
    %v578 = vmul.f32 1.0, %v577
    %v579 = vtanh.pop %v572
    %v580 = vmul.f32 %v578, %v487
    %582 = vrot.lane.b32.xlu0 %v579, 64
    %v583 = vpop.permute.xlu0 %582
    %v585 = vmul.f32 %v578, %v583
    %587 = vrot.lane.b32.xlu0 %v585, 32
    %v588 = vpop.permute.xlu0 %587
    %v590 = vadd.f32 %v580, %v588
    %v591 = vtanh.pop %v590
    %593 = vrot.lane.b32.xlu0 %v591, 64
    %v594 = vpop.permute.xlu0 %593
    %v596 = vmul.f32 %v578, %v594
    %598 = vrot.lane.b32.xlu0 %v596, 32
    %v599 = vpop.permute.xlu0 %598
    %601 = vst.msk [vmem:[#allocation3 + $0x6] sm:$0x3] %vm291, %v599
    %v602 = vld [vmem:[#allocation2 + $0x8] sm:$0x3]
    %v603 = vsel %vm184, %v599, 0
    %605 = vmatprep.subr.mxu0 0.0
    %606 = vmatpush1.msra.mxu0 %v177
    %607 = vmatprep.subr.mxu0 0.0
    %608 = vmatpush1.msra.mxu0 %v178
    %609 = vmatprep.subr.mxu0 0.0
    %610 = vmatpush1.msra.mxu0 %v179
    %611 = vmatprep.subr.mxu0 0.0
    %612 = vmatpush1.msra.mxu0 %v180
    %613 = vmatprep.subr.mxu0 0.0
    %614 = vmatpush1.msra.mxu0 0.0
    %615 = vmatprep.subr.mxu0 0.0
    %616 = vmatpush1.msra.mxu0 0.0
    %617 = vmatprep.subr.mxu0 0.0
    %618 = vmatpush1.msra.mxu0 0.0
    %619 = vmatprep.subr.mxu0 0.0
    %620 = vmatpush1.msra.mxu0 0.0
    %621 = vmatprep.subr.mxu0 0.0
    %622 = vmatpush1.msra.mxu0 0.0
    %623 = vmatprep.subr.mxu0 0.0
    %624 = vmatpush1.msra.mxu0 0.0
    %625 = vmatprep.subr.mxu0 0.0
    %626 = vmatpush1.msra.mxu0 0.0
    %627 = vmatprep.subr.mxu0 0.0
    %628 = vmatpush1.msra.mxu0 0.0
    %629 = vmatprep.subr.mxu0 0.0
    %630 = vmatpush1.msra.mxu0 0.0
    %631 = vmatprep.subr.mxu0 0.0
    %632 = vmatpush1.msra.mxu0 0.0
    %633 = vmatprep.subr.mxu0 0.0
    %634 = vmatpush1.msra.mxu0 0.0
    %635 = vmatprep.subr.mxu0 0.0
    %636 = vmatpush1.msra.mxu0 0.0
    %637 = vmatprep.subr.mxu0 0.0
    %638 = vmatpush1.msra.mxu0 0.0
    %639 = vmatprep.subr.mxu0 0.0
    %640 = vmatpush1.msra.mxu0 0.0
    %641 = vmatprep.subr.mxu0 0.0
    %642 = vmatpush1.msra.mxu0 0.0
    %643 = vmatprep.subr.mxu0 0.0
    %644 = vmatpush1.msra.mxu0 0.0
    %645 = vmatprep.subr.mxu0 0.0
    %646 = vmatpush1.msra.mxu0 0.0
    %647 = vmatprep.subr.mxu0 0.0
    %648 = vmatpush1.msra.mxu0 0.0
    %649 = vmatprep.subr.mxu0 0.0
    %650 = vmatpush1.msra.mxu0 0.0
    %651 = vmatprep.subr.mxu0 0.0
    %652 = vmatpush1.msra.mxu0 0.0
    %653 = vmatprep.subr.mxu0 0.0
    %654 = vmatpush1.msra.mxu0 0.0
    %655 = vmatprep.subr.mxu0 0.0
    %656 = vmatpush1.msra.mxu0 0.0
    %657 = vmatprep.subr.mxu0 0.0
    %658 = vmatpush1.msra.mxu0 0.0
    %659 = vmatprep.subr.mxu0 0.0
    %660 = vmatpush1.msra.mxu0 0.0
    %661 = vmatprep.subr.mxu0 0.0
    %662 = vmatpush1.msra.mxu0 0.0
    %663 = vmatprep.subr.mxu0 0.0
    %664 = vmatpush1.msra.mxu0 0.0
    %665 = vmatprep.subr.mxu0 0.0
    %666 = vmatpush1.msra.mxu0 0.0
    %667 = vmatprep.subr.mxu0 0.0
    %668 = vmatpush1.msra.mxu0 0.0
    %669 = vmatprep.mubr.f32.mxu0 0.0
    %670 = vmatmul.mubr.f32.gmra.mrb[0].mxu0 %v603
    %v671 = vpop.f32.mrb[0].mxu0
    %v672 = vadd.f32 0.0, %v671
    %v673 = vpop.f32.mrb[0].mxu0
    %674 = vdwg.mxu0
    %v675 = vadd.f32 %v602, %v672
    %v676 = vxor.u32 %v675, 2147483648
    %v677 = vmul.f32 %v676, 1.442695
    %v678 = vpow.pop %v677
    %v679 = vadd.f32 %v678, 1.0
    %v680 = vrcp.pop %v679
    %v681 = vmul.f32 1.0, %v680
    %v682 = vtanh.pop %v675
    %v683 = vmul.f32 %v681, %v590
    %685 = vrot.lane.b32.xlu0 %v682, 64
    %v686 = vpop.permute.xlu0 %685
    %v688 = vmul.f32 %v681, %v686
    %690 = vrot.lane.b32.xlu0 %v688, 32
    %v691 = vpop.permute.xlu0 %690
    %v693 = vadd.f32 %v683, %v691
    %v694 = vtanh.pop %v693
    %696 = vrot.lane.b32.xlu0 %v694, 64
    %v697 = vpop.permute.xlu0 %696
    %v699 = vmul.f32 %v681, %v697
    %701 = vrot.lane.b32.xlu0 %v699, 32
    %v702 = vpop.permute.xlu0 %701
    %704 = vst.msk [vmem:[#allocation3 + $0x8] sm:$0x3] %vm291, %v702
    %v705 = vld [vmem:[#allocation2 + $0xa] sm:$0x3]
    %v706 = vsel %vm184, %v702, 0
    %708 = vmatprep.subr.mxu0 0.0
    %709 = vmatpush1.msra.mxu0 %v177
    %710 = vmatprep.subr.mxu0 0.0
    %711 = vmatpush1.msra.mxu0 %v178
    %712 = vmatprep.subr.mxu0 0.0
    %713 = vmatpush1.msra.mxu0 %v179
    %714 = vmatprep.subr.mxu0 0.0
    %715 = vmatpush1.msra.mxu0 %v180
    %716 = vmatprep.subr.mxu0 0.0
    %717 = vmatpush1.msra.mxu0 0.0
    %718 = vmatprep.subr.mxu0 0.0
    %719 = vmatpush1.msra.mxu0 0.0
    %720 = vmatprep.subr.mxu0 0.0
    %721 = vmatpush1.msra.mxu0 0.0
    %722 = vmatprep.subr.mxu0 0.0
    %723 = vmatpush1.msra.mxu0 0.0
    %724 = vmatprep.subr.mxu0 0.0
    %725 = vmatpush1.msra.mxu0 0.0
    %726 = vmatprep.subr.mxu0 0.0
    %727 = vmatpush1.msra.mxu0 0.0
    %728 = vmatprep.subr.mxu0 0.0
    %729 = vmatpush1.msra.mxu0 0.0
    %730 = vmatprep.subr.mxu0 0.0
    %731 = vmatpush1.msra.mxu0 0.0
    %732 = vmatprep.subr.mxu0 0.0
    %733 = vmatpush1.msra.mxu0 0.0
    %734 = vmatprep.subr.mxu0 0.0
    %735 = vmatpush1.msra.mxu0 0.0
    %736 = vmatprep.subr.mxu0 0.0
    %737 = vmatpush1.msra.mxu0 0.0
    %738 = vmatprep.subr.mxu0 0.0
    %739 = vmatpush1.msra.mxu0 0.0
    %740 = vmatprep.subr.mxu0 0.0
    %741 = vmatpush1.msra.mxu0 0.0
    %742 = vmatprep.subr.mxu0 0.0
    %743 = vmatpush1.msra.mxu0 0.0
    %744 = vmatprep.subr.mxu0 0.0
    %745 = vmatpush1.msra.mxu0 0.0
    %746 = vmatprep.subr.mxu0 0.0
    %747 = vmatpush1.msra.mxu0 0.0
    %748 = vmatprep.subr.mxu0 0.0
    %749 = vmatpush1.msra.mxu0 0.0
    %750 = vmatprep.subr.mxu0 0.0
    %751 = vmatpush1.msra.mxu0 0.0
    %752 = vmatprep.subr.mxu0 0.0
    %753 = vmatpush1.msra.mxu0 0.0
    %754 = vmatprep.subr.mxu0 0.0
    %755 = vmatpush1.msra.mxu0 0.0
    %756 = vmatprep.subr.mxu0 0.0
    %757 = vmatpush1.msra.mxu0 0.0
    %758 = vmatprep.subr.mxu0 0.0
    %759 = vmatpush1.msra.mxu0 0.0
    %760 = vmatprep.subr.mxu0 0.0
    %761 = vmatpush1.msra.mxu0 0.0
    %762 = vmatprep.subr.mxu0 0.0
    %763 = vmatpush1.msra.mxu0 0.0
    %764 = vmatprep.subr.mxu0 0.0
    %765 = vmatpush1.msra.mxu0 0.0
    %766 = vmatprep.subr.mxu0 0.0
    %767 = vmatpush1.msra.mxu0 0.0
    %768 = vmatprep.subr.mxu0 0.0
    %769 = vmatpush1.msra.mxu0 0.0
    %770 = vmatprep.subr.mxu0 0.0
    %771 = vmatpush1.msra.mxu0 0.0
    %772 = vmatprep.mubr.f32.mxu0 0.0
    %773 = vmatmul.mubr.f32.gmra.mrb[0].mxu0 %v706
    %v774 = vpop.f32.mrb[0].mxu0
    %v775 = vadd.f32 0.0, %v774
    %v776 = vpop.f32.mrb[0].mxu0
    %777 = vdwg.mxu0
    %v778 = vadd.f32 %v705, %v775
    %v779 = vxor.u32 %v778, 2147483648
    %v780 = vmul.f32 %v779, 1.442695
    %v781 = vpow.pop %v780
    %v782 = vadd.f32 %v781, 1.0
    %v783 = vrcp.pop %v782
    %v784 = vmul.f32 1.0, %v783
    %v785 = vtanh.pop %v778
    %v786 = vmul.f32 %v784, %v693
    %788 = vrot.lane.b32.xlu0 %v785, 64
    %v789 = vpop.permute.xlu0 %788
    %v791 = vmul.f32 %v784, %v789
    %793 = vrot.lane.b32.xlu0 %v791, 32
    %v794 = vpop.permute.xlu0 %793
    %v796 = vadd.f32 %v786, %v794
    %v797 = vtanh.pop %v796
    %799 = vrot.lane.b32.xlu0 %v797, 64
    %v800 = vpop.permute.xlu0 %799
    %v802 = vmul.f32 %v784, %v800
    %804 = vrot.lane.b32.xlu0 %v802, 32
    %v805 = vpop.permute.xlu0 %804
    %807 = vst.msk [vmem:[#allocation3 + $0xa] sm:$0x3] %vm291, %v805
    %v808 = vld [vmem:[#allocation2 + $0xc] sm:$0x3]
    %v809 = vsel %vm184, %v805, 0
    %811 = vmatprep.subr.mxu0 0.0
    %812 = vmatpush1.msra.mxu0 %v177
    %813 = vmatprep.subr.mxu0 0.0
    %814 = vmatpush1.msra.mxu0 %v178
    %815 = vmatprep.subr.mxu0 0.0
    %816 = vmatpush1.msra.mxu0 %v179
    %817 = vmatprep.subr.mxu0 0.0
    %818 = vmatpush1.msra.mxu0 %v180
    %819 = vmatprep.subr.mxu0 0.0
    %820 = vmatpush1.msra.mxu0 0.0
    %821 = vmatprep.subr.mxu0 0.0
    %822 = vmatpush1.msra.mxu0 0.0
    %823 = vmatprep.subr.mxu0 0.0
    %824 = vmatpush1.msra.mxu0 0.0
    %825 = vmatprep.subr.mxu0 0.0
    %826 = vmatpush1.msra.mxu0 0.0
    %827 = vmatprep.subr.mxu0 0.0
    %828 = vmatpush1.msra.mxu0 0.0
    %829 = vmatprep.subr.mxu0 0.0
    %830 = vmatpush1.msra.mxu0 0.0
    %831 = vmatprep.subr.mxu0 0.0
    %832 = vmatpush1.msra.mxu0 0.0
    %833 = vmatprep.subr.mxu0 0.0
    %834 = vmatpush1.msra.mxu0 0.0
    %835 = vmatprep.subr.mxu0 0.0
    %836 = vmatpush1.msra.mxu0 0.0
    %837 = vmatprep.subr.mxu0 0.0
    %838 = vmatpush1.msra.mxu0 0.0
    %839 = vmatprep.subr.mxu0 0.0
    %840 = vmatpush1.msra.mxu0 0.0
    %841 = vmatprep.subr.mxu0 0.0
    %842 = vmatpush1.msra.mxu0 0.0
    %843 = vmatprep.subr.mxu0 0.0
    %844 = vmatpush1.msra.mxu0 0.0
    %845 = vmatprep.subr.mxu0 0.0
    %846 = vmatpush1.msra.mxu0 0.0
    %847 = vmatprep.subr.mxu0 0.0
    %848 = vmatpush1.msra.mxu0 0.0
    %849 = vmatprep.subr.mxu0 0.0
    %850 = vmatpush1.msra.mxu0 0.0
    %851 = vmatprep.subr.mxu0 0.0
    %852 = vmatpush1.msra.mxu0 0.0
    %853 = vmatprep.subr.mxu0 0.0
    %854 = vmatpush1.msra.mxu0 0.0
    %855 = vmatprep.subr.mxu0 0.0
    %856 = vmatpush1.msra.mxu0 0.0
    %857 = vmatprep.subr.mxu0 0.0
    %858 = vmatpush1.msra.mxu0 0.0
    %859 = vmatprep.subr.mxu0 0.0
    %860 = vmatpush1.msra.mxu0 0.0
    %861 = vmatprep.subr.mxu0 0.0
    %862 = vmatpush1.msra.mxu0 0.0
    %863 = vmatprep.subr.mxu0 0.0
    %864 = vmatpush1.msra.mxu0 0.0
    %865 = vmatprep.subr.mxu0 0.0
    %866 = vmatpush1.msra.mxu0 0.0
    %867 = vmatprep.subr.mxu0 0.0
    %868 = vmatpush1.msra.mxu0 0.0
    %869 = vmatprep.subr.mxu0 0.0
    %870 = vmatpush1.msra.mxu0 0.0
    %871 = vmatprep.subr.mxu0 0.0
    %872 = vmatpush1.msra.mxu0 0.0
    %873 = vmatprep.subr.mxu0 0.0
    %874 = vmatpush1.msra.mxu0 0.0
    %875 = vmatprep.mubr.f32.mxu0 0.0
    %876 = vmatmul.mubr.f32.gmra.mrb[0].mxu0 %v809
    %v877 = vpop.f32.mrb[0].mxu0
    %v878 = vadd.f32 0.0, %v877
    %v879 = vpop.f32.mrb[0].mxu0
    %880 = vdwg.mxu0
    %v881 = vadd.f32 %v808, %v878
    %v882 = vxor.u32 %v881, 2147483648
    %v883 = vmul.f32 %v882, 1.442695
    %v884 = vpow.pop %v883
    %v885 = vadd.f32 %v884, 1.0
    %v886 = vrcp.pop %v885
    %v887 = vmul.f32 1.0, %v886
    %v888 = vtanh.pop %v881
    %v889 = vmul.f32 %v887, %v796
    %891 = vrot.lane.b32.xlu0 %v888, 64
    %v892 = vpop.permute.xlu0 %891
    %v894 = vmul.f32 %v887, %v892
    %896 = vrot.lane.b32.xlu0 %v894, 32
    %v897 = vpop.permute.xlu0 %896
    %v899 = vadd.f32 %v889, %v897
    %v900 = vtanh.pop %v899
    %902 = vrot.lane.b32.xlu0 %v900, 64
    %v903 = vpop.permute.xlu0 %902
    %v905 = vmul.f32 %v887, %v903
    %907 = vrot.lane.b32.xlu0 %v905, 32
    %v908 = vpop.permute.xlu0 %907
    %910 = vst.msk [vmem:[#allocation3 + $0xc] sm:$0x3] %vm291, %v908
    %v911 = vld [vmem:[#allocation2 + $0xe] sm:$0x3]
    %v912 = vsel %vm184, %v908, 0
    %914 = vmatprep.subr.mxu0 0.0
    %915 = vmatpush1.msra.mxu0 %v177
    %916 = vmatprep.subr.mxu0 0.0
    %917 = vmatpush1.msra.mxu0 %v178
    %918 = vmatprep.subr.mxu0 0.0
    %919 = vmatpush1.msra.mxu0 %v179
    %920 = vmatprep.subr.mxu0 0.0
    %921 = vmatpush1.msra.mxu0 %v180
    %922 = vmatprep.subr.mxu0 0.0
    %923 = vmatpush1.msra.mxu0 0.0
    %924 = vmatprep.subr.mxu0 0.0
    %925 = vmatpush1.msra.mxu0 0.0
    %926 = vmatprep.subr.mxu0 0.0
    %927 = vmatpush1.msra.mxu0 0.0
    %928 = vmatprep.subr.mxu0 0.0
    %929 = vmatpush1.msra.mxu0 0.0
    %930 = vmatprep.subr.mxu0 0.0
    %931 = vmatpush1.msra.mxu0 0.0
    %932 = vmatprep.subr.mxu0 0.0
    %933 = vmatpush1.msra.mxu0 0.0
    %934 = vmatprep.subr.mxu0 0.0
    %935 = vmatpush1.msra.mxu0 0.0
    %936 = vmatprep.subr.mxu0 0.0
    %937 = vmatpush1.msra.mxu0 0.0
    %938 = vmatprep.subr.mxu0 0.0
    %939 = vmatpush1.msra.mxu0 0.0
    %940 = vmatprep.subr.mxu0 0.0
    %941 = vmatpush1.msra.mxu0 0.0
    %942 = vmatprep.subr.mxu0 0.0
    %943 = vmatpush1.msra.mxu0 0.0
    %944 = vmatprep.subr.mxu0 0.0
    %945 = vmatpush1.msra.mxu0 0.0
    %946 = vmatprep.subr.mxu0 0.0
    %947 = vmatpush1.msra.mxu0 0.0
    %948 = vmatprep.subr.mxu0 0.0
    %949 = vmatpush1.msra.mxu0 0.0
    %950 = vmatprep.subr.mxu0 0.0
    %951 = vmatpush1.msra.mxu0 0.0
    %952 = vmatprep.subr.mxu0 0.0
    %953 = vmatpush1.msra.mxu0 0.0
    %954 = vmatprep.subr.mxu0 0.0
    %955 = vmatpush1.msra.mxu0 0.0
    %956 = vmatprep.subr.mxu0 0.0
    %957 = vmatpush1.msra.mxu0 0.0
    %958 = vmatprep.subr.mxu0 0.0
    %959 = vmatpush1.msra.mxu0 0.0
    %960 = vmatprep.subr.mxu0 0.0
    %961 = vmatpush1.msra.mxu0 0.0
    %962 = vmatprep.subr.mxu0 0.0
    %963 = vmatpush1.msra.mxu0 0.0
    %964 = vmatprep.subr.mxu0 0.0
    %965 = vmatpush1.msra.mxu0 0.0
    %966 = vmatprep.subr.mxu0 0.0
    %967 = vmatpush1.msra.mxu0 0.0
    %968 = vmatprep.subr.mxu0 0.0
    %969 = vmatpush1.msra.mxu0 0.0
    %970 = vmatprep.subr.mxu0 0.0
    %971 = vmatpush1.msra.mxu0 0.0
    %972 = vmatprep.subr.mxu0 0.0
    %973 = vmatpush1.msra.mxu0 0.0
    %974 = vmatprep.subr.mxu0 0.0
    %975 = vmatpush1.msra.mxu0 0.0
    %976 = vmatprep.subr.mxu0 0.0
    %977 = vmatpush1.msra.mxu0 0.0
    %978 = vmatprep.mubr.f32.mxu0 0.0
    %979 = vmatmul.mubr.f32.gmra.mrb[0].mxu0 %v912
    %v980 = vpop.f32.mrb[0].mxu0
    %v981 = vadd.f32 0.0, %v980
    %v982 = vpop.f32.mrb[0].mxu0
    %983 = vdwg.mxu0
    %v984 = vadd.f32 %v911, %v981
    %v985 = vxor.u32 %v984, 2147483648
    %v986 = vmul.f32 %v985, 1.442695
    %v987 = vpow.pop %v986
    %v988 = vadd.f32 %v987, 1.0
    %v989 = vrcp.pop %v988
    %v990 = vmul.f32 1.0, %v989
    %v991 = vtanh.pop %v984
    %v992 = vmul.f32 %v990, %v899
    %994 = vrot.lane.b32.xlu0 %v991, 64
    %v995 = vpop.permute.xlu0 %994
    %v997 = vmul.f32 %v990, %v995
    %999 = vrot.lane.b32.xlu0 %v997, 32
    %v1000 = vpop.permute.xlu0 %999
    %v1002 = vadd.f32 %v992, %v1000
    %v1003 = vtanh.pop %v1002
    %1005 = vrot.lane.b32.xlu0 %v1003, 64
    %v1006 = vpop.permute.xlu0 %1005
    %v1008 = vmul.f32 %v990, %v1006
    %1010 = vrot.lane.b32.xlu0 %v1008, 32
    %v1011 = vpop.permute.xlu0 %1010
    %1013 = vst.msk [vmem:[#allocation3 + $0xe] sm:$0x3] %vm291, %v1011
    %v1014 = vld [vmem:[#allocation3] sm:$0xff]
    %v1015 = vld [vmem:[#allocation3 + $0x8] sm:$0xff]
    %v1016 = vld [vmem:[#allocation7] sm:$0xff]
    %v1017 = vld [vmem:[#allocation7 + $0x8] sm:$0xff]
    %v1018 = vld [vmem:[#allocation7 + $0x10] sm:$0xff]
    %v1019 = vld [vmem:[#allocation7 + $0x18] sm:$0xff]
    %v1020 = vld [vmem:[%s7] sm:$0x1]
    %v1022 = vlaneseq
    %v1023 = vshrl.u32 %v1022, 7
    %v1024 = vsub.s32 0, %v1023
    %v1025 = vrot.slane %v1020, %v1024
    %v1028 = vsel %vm184, %v1014, 0
    %v1031 = vsel %vm184, %v1015, 0
    %1033 = vmatprep.subr.mxu0 0.0
    %1034 = vmatpush1.msra.mxu0 %v1016
    %1035 = vmatprep.subr.mxu0 0.0
    %1036 = vmatpush1.msra.mxu0 %v1017
    %1037 = vmatprep.subr.mxu0 0.0
    %1038 = vmatpush1.msra.mxu0 %v1018
    %1039 = vmatprep.subr.mxu0 0.0
    %1040 = vmatpush1.msra.mxu0 %v1019
    %1041 = vmatprep.subr.mxu0 0.0
    %1042 = vmatpush1.msra.mxu0 0.0
    %1043 = vmatprep.subr.mxu0 0.0
    %1044 = vmatpush1.msra.mxu0 0.0
    %1045 = vmatprep.subr.mxu0 0.0
    %1046 = vmatpush1.msra.mxu0 0.0
    %1047 = vmatprep.subr.mxu0 0.0
    %1048 = vmatpush1.msra.mxu0 0.0
    %1049 = vmatprep.subr.mxu0 0.0
    %1050 = vmatpush1.msra.mxu0 0.0
    %1051 = vmatprep.subr.mxu0 0.0
    %1052 = vmatpush1.msra.mxu0 0.0
    %1053 = vmatprep.subr.mxu0 0.0
    %1054 = vmatpush1.msra.mxu0 0.0
    %1055 = vmatprep.subr.mxu0 0.0
    %1056 = vmatpush1.msra.mxu0 0.0
    %1057 = vmatprep.subr.mxu0 0.0
    %1058 = vmatpush1.msra.mxu0 0.0
    %1059 = vmatprep.subr.mxu0 0.0
    %1060 = vmatpush1.msra.mxu0 0.0
    %1061 = vmatprep.subr.mxu0 0.0
    %1062 = vmatpush1.msra.mxu0 0.0
    %1063 = vmatprep.subr.mxu0 0.0
    %1064 = vmatpush1.msra.mxu0 0.0
    %1065 = vmatprep.subr.mxu0 0.0
    %1066 = vmatpush1.msra.mxu0 0.0
    %1067 = vmatprep.subr.mxu0 0.0
    %1068 = vmatpush1.msra.mxu0 0.0
    %1069 = vmatprep.subr.mxu0 0.0
    %1070 = vmatpush1.msra.mxu0 0.0
    %1071 = vmatprep.subr.mxu0 0.0
    %1072 = vmatpush1.msra.mxu0 0.0
    %1073 = vmatprep.subr.mxu0 0.0
    %1074 = vmatpush1.msra.mxu0 0.0
    %1075 = vmatprep.subr.mxu0 0.0
    %1076 = vmatpush1.msra.mxu0 0.0
    %1077 = vmatprep.subr.mxu0 0.0
    %1078 = vmatpush1.msra.mxu0 0.0
    %1079 = vmatprep.subr.mxu0 0.0
    %1080 = vmatpush1.msra.mxu0 0.0
    %1081 = vmatprep.subr.mxu0 0.0
    %1082 = vmatpush1.msra.mxu0 0.0
    %1083 = vmatprep.subr.mxu0 0.0
    %1084 = vmatpush1.msra.mxu0 0.0
    %1085 = vmatprep.subr.mxu0 0.0
    %1086 = vmatpush1.msra.mxu0 0.0
    %1087 = vmatprep.subr.mxu0 0.0
    %1088 = vmatpush1.msra.mxu0 0.0
    %1089 = vmatprep.subr.mxu0 0.0
    %1090 = vmatpush1.msra.mxu0 0.0
    %1091 = vmatprep.subr.mxu0 0.0
    %1092 = vmatpush1.msra.mxu0 0.0
    %1093 = vmatprep.subr.mxu0 0.0
    %1094 = vmatpush1.msra.mxu0 0.0
    %1095 = vmatprep.subr.mxu0 0.0
    %1096 = vmatpush1.msra.mxu0 0.0
    %1097 = vmatprep.mubr.f32.mxu0 0.0
    %1098 = vmatmul.mubr.f32.gmra.mrb[0].mxu0 %v1028
    %v1099 = vpop.f32.mrb[0].mxu0
    %v1100 = vadd.f32 %v1025, %v1099
    %v1101 = vpop.f32.mrb[0].mxu0
    %1102 = vmatprep.mubr.f32.mxu0 0.0
    %1103 = vmatmul.mubr.f32.gmra.mrb[0].mxu0 %v1031
    %v1104 = vpop.f32.mrb[0].mxu0
    %v1105 = vadd.f32 %v1025, %v1104
    %v1106 = vpop.f32.mrb[0].mxu0
    %1107 = vdwg.mxu0
    %1108 = vst [vmem:[%s8] sm:$0xff] %v1100
    %1109 = vst [vmem:[%s8 + $0x8] sm:$0xff] %v1105
    %1110 = vst.msk [vmem:[#allocation9] sm:$0x3] %vm291, %v1011
    %1112 = vrot.lane.b32.xlu0 %v1002, 96
    %v1113 = vpop.permute.xlu0 %1112
    %1115 = vst.msk [vmem:[#allocation10] sm:$0x3] %vm291, %v1113
    // Predicated region
    $region42: #{encoder_forward.1} parent=1 // pred_check
      _
    $region43: #{encoder_forward.1} parent=1 // pred_check_branch
      %1117 = sbr.rel (0) target = $region45
    $region44: #{encoder_forward.1} parent=1 // pred_region
      _
    $region45: #{encoder_forward.1} parent=1 // pred_fallthru
      _
    // Predicated region
    $region46: #{encoder_forward.1} parent=1 // pred_check
      _
    $region47: #{encoder_forward.1} parent=1 // pred_check_branch
      %1119 = sbr.rel (0) target = $region49
    $region48: #{encoder_forward.1} parent=1 // pred_region
      %s1121 = ssub.s32 32, 32
      %1122 = vsyncadd [#allocation6], %s1121
      %s1124 = sshll.u32 [#allocation9], 4
      %s1125 = int_to_ptr.vmem [resolvable:$true] %s1124
      %1127 = dma.vmem_to_hbm [thread:$0]  %s1125, 32, %s9, [#allocation6]
    $region49: #{encoder_forward.1} parent=1 // pred_fallthru
      _
    // Predicated region
    $region50: #{encoder_forward.1} parent=1 // pred_check
      _
    $region51: #{encoder_forward.1} parent=1 // pred_check_branch
      %1129 = sbr.rel (0) target = $region53
    $region52: #{encoder_forward.1} parent=1 // pred_region
      %s1131 = ssub.s32 32, 32
      %1132 = vsyncadd [#allocation11], %s1131
      %s1134 = sshll.u32 [#allocation10], 4
      %s1135 = int_to_ptr.vmem [resolvable:$true] %s1134
      %1137 = dma.vmem_to_hbm [thread:$0]  %s1135, 32, %s10, [#allocation11]
    $region53: #{encoder_forward.1} parent=1 // pred_fallthru
      _
    // Predicated region
    $region54: #{encoder_forward.1} parent=1 // pred_check
      _
    $region55: #{encoder_forward.1} parent=1 // pred_check_branch
      %1139 = sbr.rel (0) target = $region57
    $region56: #{encoder_forward.1} parent=1 // pred_region
      _
    $region57: #{encoder_forward.1} parent=1 // pred_fallthru
      _
    // Predicated region
    $region58: #{encoder_forward.1} parent=1 // pred_check
      _
    $region59: #{encoder_forward.1} parent=1 // pred_check_branch
      %1141 = sbr.rel (0) target = $region61
    $region60: #{encoder_forward.1} parent=1 // pred_region
      %1142 = dma.done [#allocation6], 32
    $region61: #{encoder_forward.1} parent=1 // pred_fallthru
      _
    // Predicated region
    $region62: #{encoder_forward.1} parent=1 // pred_check
      _
    $region63: #{encoder_forward.1} parent=1 // pred_check_branch
      %1144 = sbr.rel (0) target = $region65
    $region64: #{encoder_forward.1} parent=1 // pred_region
      %1145 = dma.done [#allocation11], 32
    $region65: #{encoder_forward.1} parent=1 // pred_fallthru
      _
    %1146 = vsyncpa [#allocation5], 1
    %1147 = vsyncpa [#allocation8], 1
    %1148 = vsyncpa [#allocation6], 1
    %1149 = vsyncpa [#allocation11], 1

</llo_original>
